<compile_context>
chip_gen: v7x
topology: tpu7x:2x2x1
jax: 0.10.0
libtpu: 0.0.40
codegen_flags: <defaults>
</compile_context>

<pallas_src>
import functools

import jax
import jax.numpy as jnp
from jax.experimental import pallas as pl
from jax.experimental.pallas import tpu as pltpu


def _patch_merge_kernel(a_ref, b_ref, wa_ref, wb_ref, bias_ref, o_ref, *,
                        eps, inv_nfeat, mm_dtype):
    # a_ref:    (tx, Yo, 2C)  rows [x0 | x2]   (even-z, even-x; y even|odd in lanes)
    # b_ref:    (tx, Yo, 2C)  rows [x1 | x3]   (odd-z , odd-x )
    # wa_ref:   (2C, 2C_out)  gamma-folded weight rows for [x0; x2]
    # wb_ref:   (2C, 2C_out)  gamma-folded weight rows for [x1; x3]
    # bias_ref: (1,  2C_out)  beta @ W^T
    # o_ref:    (tx, Yo, 2C_out)
    wa = wa_ref[...]
    wb = wb_ref[...]
    yo = o_ref.shape[1]
    n_out = o_ref.shape[2]
    # hoist the bias broadcast out of the unrolled loop
    bias = jnp.broadcast_to(bias_ref[...].astype(jnp.float32), (yo, n_out))

    tx = a_ref.shape[0]
    for i in range(tx):  # static unroll; each slice is a clean 2-D problem
        a = a_ref[i].astype(jnp.float32)          # (Yo, 2C)
        b = b_ref[i].astype(jnp.float32)          # (Yo, 2C)

        # LayerNorm statistics over the full 4C features (split across a and b),
        # kept in f32.
        row_sum = (jnp.sum(a, axis=-1, keepdims=True)
                   + jnp.sum(b, axis=-1, keepdims=True))
        mean = row_sum * inv_nfeat
        ca = a - mean
        cb = b - mean
        var = (jnp.sum(ca * ca, axis=-1, keepdims=True)
               + jnp.sum(cb * cb, axis=-1, keepdims=True)) * inv_nfeat
        inv_std = jax.lax.rsqrt(var + eps)

        an = (ca * inv_std).astype(mm_dtype)
        bn = (cb * inv_std).astype(mm_dtype)

        out = jnp.dot(an, wa, preferred_element_type=jnp.float32)
        out = out + jnp.dot(bn, wb, preferred_element_type=jnp.float32)
        out = out + bias
        o_ref[i] = out.astype(o_ref.dtype)


def _pick_tx(xo, yo, target_tokens, max_unroll):
    """Largest divisor of xo such that tx*yo <= target_tokens and tx <= max_unroll."""
    budget = max(1, target_tokens // max(yo, 1))
    budget = min(budget, max_unroll, xo)
    best = 1
    for d in range(1, xo + 1):
        if xo % d == 0 and d <= budget:
            best = d
    return best


def patch_merging_forward(x, gamma, beta, weight, *, eps=1e-5,
                          target_tokens=512, max_unroll=32,
                          use_bf16_matmul=True):
    """Pallas implementation of PatchMerging.forward.

    x:      (B, Z, X, Y, C)
    gamma:  (4*C,)  LayerNorm weight
    beta:   (4*C,)  LayerNorm bias
    weight: (2*C, 4*C) torch-style Linear weight (out_features, in_features)
    returns (B, Z//2, X//2, Y//2, 2*C)
    """
    B, Z, X, Y, C = x.shape
    assert Z % 2 == 0 and X % 2 == 0 and Y % 2 == 0
    Zo, Xo, Yo = Z // 2, X // 2, Y // 2
    c2 = 2 * C
    c4 = 4 * C
    n_out = 2 * C
    mm_dtype = jnp.bfloat16 if use_bf16_matmul else jnp.float32

    # Free (contiguous) reshape: split X -> (Xo, 2) and fold the y-parity into
    # channels:  x_r[b, z, xo, px, yo, 0:C] = x[b, z, 2*xo+px, 2*yo,   :]
    #            x_r[b, z, xo, px, yo, C: ] = x[b, z, 2*xo+px, 2*yo+1, :]
    x_r = x.reshape(B, Z, Xo, 2, Yo, c2)

    # Fold the LayerNorm affine into the reduction weight:
    #   (xn*gamma + beta) @ W^T = xn @ (gamma[:,None]*W^T) + beta @ W^T
    wt = weight.astype(jnp.float32).T                       # (4C, 2C)
    wg = gamma.astype(jnp.float32)[:, None] * wt            # (4C, 2C)
    bias = (beta.astype(jnp.float32) @ wt).reshape(1, n_out)
    # Reorder rows to match the per-input lane layout ([x0|x2] and [x1|x3]).
    w_a = jnp.concatenate([wg[0:C], wg[2 * C:3 * C]], axis=0).astype(mm_dtype)
    w_b = jnp.concatenate([wg[C:2 * C], wg[3 * C:4 * C]], axis=0).astype(mm_dtype)

    # Tile: each grid step handles tx * Yo output tokens (tx divides Xo -> no tail).
    tx = _pick_tx(Xo, Yo, target_tokens, max_unroll)
    n_xb = Xo // tx
    grid = (B, Zo, n_xb)

    # even-z / even-x rows  ([x0 | x2] features)
    a_spec = pl.BlockSpec(
        (None, None, tx, None, Yo, c2),
        lambda b, zo, xb: (b, 2 * zo, xb, 0, 0, 0))
    # odd-z / odd-x rows    ([x1 | x3] features)
    b_spec = pl.BlockSpec(
        (None, None, tx, None, Yo, c2),
        lambda b, zo, xb: (b, 2 * zo + 1, xb, 1, 0, 0))
    wa_spec = pl.BlockSpec((c2, n_out), lambda b, zo, xb: (0, 0))
    wb_spec = pl.BlockSpec((c2, n_out), lambda b, zo, xb: (0, 0))
    bias_spec = pl.BlockSpec((1, n_out), lambda b, zo, xb: (0, 0))
    out_spec = pl.BlockSpec(
        (None, None, tx, Yo, n_out),
        lambda b, zo, xb: (b, zo, xb, 0, 0))

    # VMEM budget (double-buffered inputs/output + resident weights); only raise
    # the scoped limit when the tiles actually need it (v7x has 64 MiB per TC).
    itemsize_in = jnp.dtype(x.dtype).itemsize
    itemsize_mm = jnp.dtype(mm_dtype).itemsize
    a_bytes = tx * Yo * c2 * itemsize_in
    o_bytes = tx * Yo * n_out * itemsize_in
    w_bytes = 2 * c2 * n_out * itemsize_mm + n_out * 4
    vmem_need = 2 * (2 * a_bytes + o_bytes) + w_bytes + (2 << 20)
    vmem_limit = None if vmem_need <= (30 << 20) else int(min(vmem_need, 64 << 20))

    out = pl.pallas_call(
        functools.partial(_patch_merge_kernel, eps=eps,
                          inv_nfeat=1.0 / float(c4), mm_dtype=mm_dtype),
        out_shape=jax.ShapeDtypeStruct((B, Zo, Xo, Yo, n_out), x.dtype),
        grid_spec=pltpu.PrefetchScalarGridSpec(
            num_scalar_prefetch=0,
            grid=grid,
            in_specs=[a_spec, b_spec, wa_spec, wb_spec, bias_spec],
            out_specs=out_spec,
        ),
        compiler_params=pltpu.CompilerParams(
            dimension_semantics=("parallel", "parallel", "parallel"),
            vmem_limit_bytes=vmem_limit,
        ),
    )(x_r, x_r, w_a, w_b, bias)

    return out


def _reference(x, gamma, beta, weight, eps=1e-5):
    x0 = x[:, 0::2, 0::2, 0::2, :]
    x1 = x[:, 1::2, 1::2, 0::2, :]
    x2 = x[:, 0::2, 0::2, 1::2, :]
    x3 = x[:, 1::2, 1::2, 1::2, :]
    xc = jnp.concatenate([x0, x1, x2, x3], axis=-1).astype(jnp.float32)
    mean = jnp.mean(xc, axis=-1, keepdims=True)
    var = jnp.mean((xc - mean) ** 2, axis=-1, keepdims=True)
    xn = (xc - mean) / jnp.sqrt(var + eps)
    y = xn * gamma + beta
    return jnp.einsum("...i,oi->...o", y, weight,
                      precision=jax.lax.Precision.HIGHEST)


if __name__ == "__main__":
    # Small shapes consistent with the module.  C = 64 so that 4C = 256 and the
    # output width 2C = 128 is lane-dense (the real model uses C in {96,192,384},
    # all of which give lane-dense >=128-wide outputs).
    B, Z, X, Y, C = 2, 8, 8, 8, 64
    key = jax.random.PRNGKey(0)
    kx, kw, kg, kb = jax.random.split(key, 4)

    x = jax.random.normal(kx, (B, Z, X, Y, C), dtype=jnp.float32)
    # nn.Linear(4C, 2C, bias=False) weight and nn.LayerNorm(4C) params.
    weight = jax.random.normal(kw, (2 * C, 4 * C), dtype=jnp.float32) * 0.05
    gamma = 1.0 + 0.1 * jax.random.normal(kg, (4 * C,), dtype=jnp.float32)
    beta = 0.1 * jax.random.normal(kb, (4 * C,), dtype=jnp.float32)

    ref = _reference(x, gamma, beta, weight)

    # Exact f32 path.
    out_f32 = patch_merging_forward(x, gamma, beta, weight, use_bf16_matmul=False)
    out_f32 = jax.block_until_ready(out_f32)
    assert out_f32.shape == (B, Z // 2, X // 2, Y // 2, 2 * C), out_f32.shape
    assert jnp.allclose(out_f32, ref, atol=1e-4, rtol=1e-4), float(
        jnp.max(jnp.abs(out_f32 - ref)))

    # Fast bf16-in / f32-accumulate MXU path (LN stays in f32).
    out_bf16 = patch_merging_forward(x, gamma, beta, weight, use_bf16_matmul=True)
    out_bf16 = jax.block_until_ready(out_bf16)
    assert out_bf16.shape == (B, Z // 2, X // 2, Y // 2, 2 * C), out_bf16.shape
    assert jnp.allclose(out_bf16, ref, atol=5e-2, rtol=5e-2), float(
        jnp.max(jnp.abs(out_bf16 - ref)))

    print("KERNEL_OK")
</pallas_src>

<mosaic_0001>
module attributes {stable_mosaic.version = 11 : i64} {
  func.func @_patch_merge_kernel(%arg0: i32, %arg1: i32, %arg2: i32, %arg3: memref<1x1x4x1x4x128xf32, #tpu.memory_space<vmem>>, %arg4: memref<1x1x4x1x4x128xf32, #tpu.memory_space<vmem>>, %arg5: memref<128x128xf32, #tpu.memory_space<vmem>>, %arg6: memref<128x128xf32, #tpu.memory_space<vmem>>, %arg7: memref<1x128xf32, #tpu.memory_space<vmem>>, %arg8: memref<1x1x4x4x128xf32, #tpu.memory_space<vmem>>) attributes {dimension_semantics = [#tpu.dimension_semantics<parallel>, #tpu.dimension_semantics<parallel>, #tpu.dimension_semantics<parallel>], iteration_bounds = array<i64: 2, 4, 1>, scalar_prefetch = 0 : i64, scratch_operands = 0 : i64, tpu.core_type = #tpu.core_type<tc>, window_params = [{transform_indices = @transform_0, window_bounds = array<i64: 1, 1, 4, 1, 4, 128>}, {transform_indices = @transform_1, window_bounds = array<i64: 1, 1, 4, 1, 4, 128>}, {pipeline_mode = #tpu.pipeline_mode<synchronous>, transform_indices = @transform_2, window_bounds = array<i64: 128, 128>}, {pipeline_mode = #tpu.pipeline_mode<synchronous>, transform_indices = @transform_3, window_bounds = array<i64: 128, 128>}, {pipeline_mode = #tpu.pipeline_mode<synchronous>, transform_indices = @transform_4, window_bounds = array<i64: 1, 128>}, {transform_indices = @transform_5, window_bounds = array<i64: 1, 1, 4, 4, 128>}]} {
    %c0 = arith.constant 0 : index
    %c0_0 = arith.constant 0 : index
    %0 = vector.load %arg5[%c0, %c0_0] : memref<128x128xf32, #tpu.memory_space<vmem>>, vector<128x128xf32>
    %c0_1 = arith.constant 0 : index
    %c0_2 = arith.constant 0 : index
    %1 = vector.load %arg6[%c0_1, %c0_2] : memref<128x128xf32, #tpu.memory_space<vmem>>, vector<128x128xf32>
    %c0_3 = arith.constant 0 : index
    %c0_4 = arith.constant 0 : index
    %2 = vector.load %arg7[%c0_3, %c0_4] : memref<1x128xf32, #tpu.memory_space<vmem>>, vector<1x128xf32>
    %3 = vector.shape_cast %2 : vector<1x128xf32> to vector<1x128xf32>
    %4 = vector.broadcast %3 : vector<1x128xf32> to vector<4x128xf32>
    %c0_5 = arith.constant 0 : index
    %c0_6 = arith.constant 0 : index
    %c0_7 = arith.constant 0 : index
    %c0_8 = arith.constant 0 : index
    %c0_9 = arith.constant 0 : index
    %c0_10 = arith.constant 0 : index
    %5 = vector.load %arg3[%c0_5, %c0_6, %c0_7, %c0_8, %c0_9, %c0_10] : memref<1x1x4x1x4x128xf32, #tpu.memory_space<vmem>>, vector<1x1x1x1x4x128xf32>
    %6 = vector.shape_cast %5 : vector<1x1x1x1x4x128xf32> to vector<4x128xf32>
    %c0_11 = arith.constant 0 : index
    %c0_12 = arith.constant 0 : index
    %c0_13 = arith.constant 0 : index
    %c0_14 = arith.constant 0 : index
    %c0_15 = arith.constant 0 : index
    %c0_16 = arith.constant 0 : index
    %7 = vector.load %arg4[%c0_11, %c0_12, %c0_13, %c0_14, %c0_15, %c0_16] : memref<1x1x4x1x4x128xf32, #tpu.memory_space<vmem>>, vector<1x1x1x1x4x128xf32>
    %8 = vector.shape_cast %7 : vector<1x1x1x1x4x128xf32> to vector<4x128xf32>
    %cst = arith.constant dense<0.000000e+00> : vector<4xf32>
    %9 = vector.multi_reduction <add>, %6, %cst [1] : vector<4x128xf32> to vector<4xf32>
    %10 = vector.shape_cast %9 : vector<4xf32> to vector<4x1xf32>
    %cst_17 = arith.constant dense<0.000000e+00> : vector<4xf32>
    %11 = vector.multi_reduction <add>, %8, %cst_17 [1] : vector<4x128xf32> to vector<4xf32>
    %12 = vector.shape_cast %11 : vector<4xf32> to vector<4x1xf32>
    %13 = arith.addf %10, %12 : vector<4x1xf32>
    %cst_18 = arith.constant 3.906250e-03 : f32
    %14 = vector.broadcast %cst_18 : f32 to vector<4x1xf32>
    %15 = arith.mulf %13, %14 : vector<4x1xf32>
    %16 = vector.broadcast %15 : vector<4x1xf32> to vector<4x128xf32>
    %17 = arith.subf %6, %16 : vector<4x128xf32>
    %18 = vector.broadcast %15 : vector<4x1xf32> to vector<4x128xf32>
    %19 = arith.subf %8, %18 : vector<4x128xf32>
    %20 = arith.mulf %17, %17 : vector<4x128xf32>
    %cst_19 = arith.constant dense<0.000000e+00> : vector<4xf32>
    %21 = vector.multi_reduction <add>, %20, %cst_19 [1] : vector<4x128xf32> to vector<4xf32>
    %22 = vector.shape_cast %21 : vector<4xf32> to vector<4x1xf32>
    %23 = arith.mulf %19, %19 : vector<4x128xf32>
    %cst_20 = arith.constant dense<0.000000e+00> : vector<4xf32>
    %24 = vector.multi_reduction <add>, %23, %cst_20 [1] : vector<4x128xf32> to vector<4xf32>
    %25 = vector.shape_cast %24 : vector<4xf32> to vector<4x1xf32>
    %26 = arith.addf %22, %25 : vector<4x1xf32>
    %cst_21 = arith.constant 3.906250e-03 : f32
    %27 = vector.broadcast %cst_21 : f32 to vector<4x1xf32>
    %28 = arith.mulf %26, %27 : vector<4x1xf32>
    %cst_22 = arith.constant 9.99999974E-6 : f32
    %29 = vector.broadcast %cst_22 : f32 to vector<4x1xf32>
    %30 = arith.addf %28, %29 : vector<4x1xf32>
    %31 = math.rsqrt %30 : vector<4x1xf32>
    %32 = vector.broadcast %31 : vector<4x1xf32> to vector<4x128xf32>
    %33 = arith.mulf %17, %32 : vector<4x128xf32>
    %34 = vector.broadcast %31 : vector<4x1xf32> to vector<4x128xf32>
    %35 = arith.mulf %19, %34 : vector<4x128xf32>
    %cst_23 = arith.constant dense<0.000000e+00> : vector<4x128xf32>
    %36 = tpu.matmul %33, %0, %cst_23 {dimension_numbers = #tpu.dot_dimension_numbers<[1], [0], [0], [1], [0, 0, 1, 1], [], []>} : vector<4x128xf32>, vector<128x128xf32>, vector<4x128xf32> -> vector<4x128xf32>
    %cst_24 = arith.constant dense<0.000000e+00> : vector<4x128xf32>
    %37 = tpu.matmul %35, %1, %cst_24 {dimension_numbers = #tpu.dot_dimension_numbers<[1], [0], [0], [1], [0, 0, 1, 1], [], []>} : vector<4x128xf32>, vector<128x128xf32>, vector<4x128xf32> -> vector<4x128xf32>
    %38 = arith.addf %36, %37 : vector<4x128xf32>
    %39 = arith.addf %38, %4 : vector<4x128xf32>
    %c0_25 = arith.constant 0 : index
    %c0_26 = arith.constant 0 : index
    %c0_27 = arith.constant 0 : index
    %c0_28 = arith.constant 0 : index
    %c0_29 = arith.constant 0 : index
    %40 = vector.load %arg8[%c0_25, %c0_26, %c0_27, %c0_28, %c0_29] : memref<1x1x4x4x128xf32, #tpu.memory_space<vmem>>, vector<1x1x1x4x128xf32>
    %41 = vector.shape_cast %40 : vector<1x1x1x4x128xf32> to vector<4x128xf32>
    %42 = vector.shape_cast %39 : vector<4x128xf32> to vector<1x1x1x4x128xf32>
    tpu.vector_store %arg8[%c0_25, %c0_26, %c0_27, %c0_28, %c0_29], %42 {strides = array<i32>} : memref<1x1x4x4x128xf32, #tpu.memory_space<vmem>>, vector<1x1x1x4x128xf32>,
    %c0_30 = arith.constant 0 : index
    %c0_31 = arith.constant 0 : index
    %c1 = arith.constant 1 : index
    %c0_32 = arith.constant 0 : index
    %c0_33 = arith.constant 0 : index
    %c0_34 = arith.constant 0 : index
    %43 = vector.load %arg3[%c0_30, %c0_31, %c1, %c0_32, %c0_33, %c0_34] : memref<1x1x4x1x4x128xf32, #tpu.memory_space<vmem>>, vector<1x1x1x1x4x128xf32>
    %44 = vector.shape_cast %43 : vector<1x1x1x1x4x128xf32> to vector<4x128xf32>
    %c0_35 = arith.constant 0 : index
    %c0_36 = arith.constant 0 : index
    %c1_37 = arith.constant 1 : index
    %c0_38 = arith.constant 0 : index
    %c0_39 = arith.constant 0 : index
    %c0_40 = arith.constant 0 : index
    %45 = vector.load %arg4[%c0_35, %c0_36, %c1_37, %c0_38, %c0_39, %c0_40] : memref<1x1x4x1x4x128xf32, #tpu.memory_space<vmem>>, vector<1x1x1x1x4x128xf32>
    %46 = vector.shape_cast %45 : vector<1x1x1x1x4x128xf32> to vector<4x128xf32>
    %cst_41 = arith.constant dense<0.000000e+00> : vector<4xf32>
    %47 = vector.multi_reduction <add>, %44, %cst_41 [1] : vector<4x128xf32> to vector<4xf32>
    %48 = vector.shape_cast %47 : vector<4xf32> to vector<4x1xf32>
    %cst_42 = arith.constant dense<0.000000e+00> : vector<4xf32>
    %49 = vector.multi_reduction <add>, %46, %cst_42 [1] : vector<4x128xf32> to vector<4xf32>
    %50 = vector.shape_cast %49 : vector<4xf32> to vector<4x1xf32>
    %51 = arith.addf %48, %50 : vector<4x1xf32>
    %cst_43 = arith.constant 3.906250e-03 : f32
    %52 = vector.broadcast %cst_43 : f32 to vector<4x1xf32>
    %53 = arith.mulf %51, %52 : vector<4x1xf32>
    %54 = vector.broadcast %53 : vector<4x1xf32> to vector<4x128xf32>
    %55 = arith.subf %44, %54 : vector<4x128xf32>
    %56 = vector.broadcast %53 : vector<4x1xf32> to vector<4x128xf32>
    %57 = arith.subf %46, %56 : vector<4x128xf32>
    %58 = arith.mulf %55, %55 : vector<4x128xf32>
    %cst_44 = arith.constant dense<0.000000e+00> : vector<4xf32>
    %59 = vector.multi_reduction <add>, %58, %cst_44 [1] : vector<4x128xf32> to vector<4xf32>
    %60 = vector.shape_cast %59 : vector<4xf32> to vector<4x1xf32>
    %61 = arith.mulf %57, %57 : vector<4x128xf32>
    %cst_45 = arith.constant dense<0.000000e+00> : vector<4xf32>
    %62 = vector.multi_reduction <add>, %61, %cst_45 [1] : vector<4x128xf32> to vector<4xf32>
    %63 = vector.shape_cast %62 : vector<4xf32> to vector<4x1xf32>
    %64 = arith.addf %60, %63 : vector<4x1xf32>
    %cst_46 = arith.constant 3.906250e-03 : f32
    %65 = vector.broadcast %cst_46 : f32 to vector<4x1xf32>
    %66 = arith.mulf %64, %65 : vector<4x1xf32>
    %cst_47 = arith.constant 9.99999974E-6 : f32
    %67 = vector.broadcast %cst_47 : f32 to vector<4x1xf32>
    %68 = arith.addf %66, %67 : vector<4x1xf32>
    %69 = math.rsqrt %68 : vector<4x1xf32>
    %70 = vector.broadcast %69 : vector<4x1xf32> to vector<4x128xf32>
    %71 = arith.mulf %55, %70 : vector<4x128xf32>
    %72 = vector.broadcast %69 : vector<4x1xf32> to vector<4x128xf32>
    %73 = arith.mulf %57, %72 : vector<4x128xf32>
    %cst_48 = arith.constant dense<0.000000e+00> : vector<4x128xf32>
    %74 = tpu.matmul %71, %0, %cst_48 {dimension_numbers = #tpu.dot_dimension_numbers<[1], [0], [0], [1], [0, 0, 1, 1], [], []>} : vector<4x128xf32>, vector<128x128xf32>, vector<4x128xf32> -> vector<4x128xf32>
    %cst_49 = arith.constant dense<0.000000e+00> : vector<4x128xf32>
    %75 = tpu.matmul %73, %1, %cst_49 {dimension_numbers = #tpu.dot_dimension_numbers<[1], [0], [0], [1], [0, 0, 1, 1], [], []>} : vector<4x128xf32>, vector<128x128xf32>, vector<4x128xf32> -> vector<4x128xf32>
    %76 = arith.addf %74, %75 : vector<4x128xf32>
    %77 = arith.addf %76, %4 : vector<4x128xf32>
    %c0_50 = arith.constant 0 : index
    %c0_51 = arith.constant 0 : index
    %c1_52 = arith.constant 1 : index
    %c0_53 = arith.constant 0 : index
    %c0_54 = arith.constant 0 : index
    %78 = vector.load %arg8[%c0_50, %c0_51, %c1_52, %c0_53, %c0_54] : memref<1x1x4x4x128xf32, #tpu.memory_space<vmem>>, vector<1x1x1x4x128xf32>
    %79 = vector.shape_cast %78 : vector<1x1x1x4x128xf32> to vector<4x128xf32>
    %80 = vector.shape_cast %77 : vector<4x128xf32> to vector<1x1x1x4x128xf32>
    tpu.vector_store %arg8[%c0_50, %c0_51, %c1_52, %c0_53, %c0_54], %80 {strides = array<i32>} : memref<1x1x4x4x128xf32, #tpu.memory_space<vmem>>, vector<1x1x1x4x128xf32>,
    %c0_55 = arith.constant 0 : index
    %c0_56 = arith.constant 0 : index
    %c2 = arith.constant 2 : index
    %c0_57 = arith.constant 0 : index
    %c0_58 = arith.constant 0 : index
    %c0_59 = arith.constant 0 : index
    %81 = vector.load %arg3[%c0_55, %c0_56, %c2, %c0_57, %c0_58, %c0_59] : memref<1x1x4x1x4x128xf32, #tpu.memory_space<vmem>>, vector<1x1x1x1x4x128xf32>
    %82 = vector.shape_cast %81 : vector<1x1x1x1x4x128xf32> to vector<4x128xf32>
    %c0_60 = arith.constant 0 : index
    %c0_61 = arith.constant 0 : index
    %c2_62 = arith.constant 2 : index
    %c0_63 = arith.constant 0 : index
    %c0_64 = arith.constant 0 : index
    %c0_65 = arith.constant 0 : index
    %83 = vector.load %arg4[%c0_60, %c0_61, %c2_62, %c0_63, %c0_64, %c0_65] : memref<1x1x4x1x4x128xf32, #tpu.memory_space<vmem>>, vector<1x1x1x1x4x128xf32>
    %84 = vector.shape_cast %83 : vector<1x1x1x1x4x128xf32> to vector<4x128xf32>
    %cst_66 = arith.constant dense<0.000000e+00> : vector<4xf32>
    %85 = vector.multi_reduction <add>, %82, %cst_66 [1] : vector<4x128xf32> to vector<4xf32>
    %86 = vector.shape_cast %85 : vector<4xf32> to vector<4x1xf32>
    %cst_67 = arith.constant dense<0.000000e+00> : vector<4xf32>
    %87 = vector.multi_reduction <add>, %84, %cst_67 [1] : vector<4x128xf32> to vector<4xf32>
    %88 = vector.shape_cast %87 : vector<4xf32> to vector<4x1xf32>
    %89 = arith.addf %86, %88 : vector<4x1xf32>
    %cst_68 = arith.constant 3.906250e-03 : f32
    %90 = vector.broadcast %cst_68 : f32 to vector<4x1xf32>
    %91 = arith.mulf %89, %90 : vector<4x1xf32>
    %92 = vector.broadcast %91 : vector<4x1xf32> to vector<4x128xf32>
    %93 = arith.subf %82, %92 : vector<4x128xf32>
    %94 = vector.broadcast %91 : vector<4x1xf32> to vector<4x128xf32>
    %95 = arith.subf %84, %94 : vector<4x128xf32>
    %96 = arith.mulf %93, %93 : vector<4x128xf32>
    %cst_69 = arith.constant dense<0.000000e+00> : vector<4xf32>
    %97 = vector.multi_reduction <add>, %96, %cst_69 [1] : vector<4x128xf32> to vector<4xf32>
    %98 = vector.shape_cast %97 : vector<4xf32> to vector<4x1xf32>
    %99 = arith.mulf %95, %95 : vector<4x128xf32>
    %cst_70 = arith.constant dense<0.000000e+00> : vector<4xf32>
    %100 = vector.multi_reduction <add>, %99, %cst_70 [1] : vector<4x128xf32> to vector<4xf32>
    %101 = vector.shape_cast %100 : vector<4xf32> to vector<4x1xf32>
    %102 = arith.addf %98, %101 : vector<4x1xf32>
    %cst_71 = arith.constant 3.906250e-03 : f32
    %103 = vector.broadcast %cst_71 : f32 to vector<4x1xf32>
    %104 = arith.mulf %102, %103 : vector<4x1xf32>
    %cst_72 = arith.constant 9.99999974E-6 : f32
    %105 = vector.broadcast %cst_72 : f32 to vector<4x1xf32>
    %106 = arith.addf %104, %105 : vector<4x1xf32>
    %107 = math.rsqrt %106 : vector<4x1xf32>
    %108 = vector.broadcast %107 : vector<4x1xf32> to vector<4x128xf32>
    %109 = arith.mulf %93, %108 : vector<4x128xf32>
    %110 = vector.broadcast %107 : vector<4x1xf32> to vector<4x128xf32>
    %111 = arith.mulf %95, %110 : vector<4x128xf32>
    %cst_73 = arith.constant dense<0.000000e+00> : vector<4x128xf32>
    %112 = tpu.matmul %109, %0, %cst_73 {dimension_numbers = #tpu.dot_dimension_numbers<[1], [0], [0], [1], [0, 0, 1, 1], [], []>} : vector<4x128xf32>, vector<128x128xf32>, vector<4x128xf32> -> vector<4x128xf32>
    %cst_74 = arith.constant dense<0.000000e+00> : vector<4x128xf32>
    %113 = tpu.matmul %111, %1, %cst_74 {dimension_numbers = #tpu.dot_dimension_numbers<[1], [0], [0], [1], [0, 0, 1, 1], [], []>} : vector<4x128xf32>, vector<128x128xf32>, vector<4x128xf32> -> vector<4x128xf32>
    %114 = arith.addf %112, %113 : vector<4x128xf32>
    %115 = arith.addf %114, %4 : vector<4x128xf32>
    %c0_75 = arith.constant 0 : index
    %c0_76 = arith.constant 0 : index
    %c2_77 = arith.constant 2 : index
    %c0_78 = arith.constant 0 : index
    %c0_79 = arith.constant 0 : index
    %116 = vector.load %arg8[%c0_75, %c0_76, %c2_77, %c0_78, %c0_79] : memref<1x1x4x4x128xf32, #tpu.memory_space<vmem>>, vector<1x1x1x4x128xf32>
    %117 = vector.shape_cast %116 : vector<1x1x1x4x128xf32> to vector<4x128xf32>
    %118 = vector.shape_cast %115 : vector<4x128xf32> to vector<1x1x1x4x128xf32>
    tpu.vector_store %arg8[%c0_75, %c0_76, %c2_77, %c0_78, %c0_79], %118 {strides = array<i32>} : memref<1x1x4x4x128xf32, #tpu.memory_space<vmem>>, vector<1x1x1x4x128xf32>,
    %c0_80 = arith.constant 0 : index
    %c0_81 = arith.constant 0 : index
    %c3 = arith.constant 3 : index
    %c0_82 = arith.constant 0 : index
    %c0_83 = arith.constant 0 : index
    %c0_84 = arith.constant 0 : index
    %119 = vector.load %arg3[%c0_80, %c0_81, %c3, %c0_82, %c0_83, %c0_84] : memref<1x1x4x1x4x128xf32, #tpu.memory_space<vmem>>, vector<1x1x1x1x4x128xf32>
    %120 = vector.shape_cast %119 : vector<1x1x1x1x4x128xf32> to vector<4x128xf32>
    %c0_85 = arith.constant 0 : index
    %c0_86 = arith.constant 0 : index
    %c3_87 = arith.constant 3 : index
    %c0_88 = arith.constant 0 : index
    %c0_89 = arith.constant 0 : index
    %c0_90 = arith.constant 0 : index
    %121 = vector.load %arg4[%c0_85, %c0_86, %c3_87, %c0_88, %c0_89, %c0_90] : memref<1x1x4x1x4x128xf32, #tpu.memory_space<vmem>>, vector<1x1x1x1x4x128xf32>
    %122 = vector.shape_cast %121 : vector<1x1x1x1x4x128xf32> to vector<4x128xf32>
    %cst_91 = arith.constant dense<0.000000e+00> : vector<4xf32>
    %123 = vector.multi_reduction <add>, %120, %cst_91 [1] : vector<4x128xf32> to vector<4xf32>
    %124 = vector.shape_cast %123 : vector<4xf32> to vector<4x1xf32>
    %cst_92 = arith.constant dense<0.000000e+00> : vector<4xf32>
    %125 = vector.multi_reduction <add>, %122, %cst_92 [1] : vector<4x128xf32> to vector<4xf32>
    %126 = vector.shape_cast %125 : vector<4xf32> to vector<4x1xf32>
    %127 = arith.addf %124, %126 : vector<4x1xf32>
    %cst_93 = arith.constant 3.906250e-03 : f32
    %128 = vector.broadcast %cst_93 : f32 to vector<4x1xf32>
    %129 = arith.mulf %127, %128 : vector<4x1xf32>
    %130 = vector.broadcast %129 : vector<4x1xf32> to vector<4x128xf32>
    %131 = arith.subf %120, %130 : vector<4x128xf32>
    %132 = vector.broadcast %129 : vector<4x1xf32> to vector<4x128xf32>
    %133 = arith.subf %122, %132 : vector<4x128xf32>
    %134 = arith.mulf %131, %131 : vector<4x128xf32>
    %cst_94 = arith.constant dense<0.000000e+00> : vector<4xf32>
    %135 = vector.multi_reduction <add>, %134, %cst_94 [1] : vector<4x128xf32> to vector<4xf32>
    %136 = vector.shape_cast %135 : vector<4xf32> to vector<4x1xf32>
    %137 = arith.mulf %133, %133 : vector<4x128xf32>
    %cst_95 = arith.constant dense<0.000000e+00> : vector<4xf32>
    %138 = vector.multi_reduction <add>, %137, %cst_95 [1] : vector<4x128xf32> to vector<4xf32>
    %139 = vector.shape_cast %138 : vector<4xf32> to vector<4x1xf32>
    %140 = arith.addf %136, %139 : vector<4x1xf32>
    %cst_96 = arith.constant 3.906250e-03 : f32
    %141 = vector.broadcast %cst_96 : f32 to vector<4x1xf32>
    %142 = arith.mulf %140, %141 : vector<4x1xf32>
    %cst_97 = arith.constant 9.99999974E-6 : f32
    %143 = vector.broadcast %cst_97 : f32 to vector<4x1xf32>
    %144 = arith.addf %142, %143 : vector<4x1xf32>
    %145 = math.rsqrt %144 : vector<4x1xf32>
    %146 = vector.broadcast %145 : vector<4x1xf32> to vector<4x128xf32>
    %147 = arith.mulf %131, %146 : vector<4x128xf32>
    %148 = vector.broadcast %145 : vector<4x1xf32> to vector<4x128xf32>
    %149 = arith.mulf %133, %148 : vector<4x128xf32>
    %cst_98 = arith.constant dense<0.000000e+00> : vector<4x128xf32>
    %150 = tpu.matmul %147, %0, %cst_98 {dimension_numbers = #tpu.dot_dimension_numbers<[1], [0], [0], [1], [0, 0, 1, 1], [], []>} : vector<4x128xf32>, vector<128x128xf32>, vector<4x128xf32> -> vector<4x128xf32>
    %cst_99 = arith.constant dense<0.000000e+00> : vector<4x128xf32>
    %151 = tpu.matmul %149, %1, %cst_99 {dimension_numbers = #tpu.dot_dimension_numbers<[1], [0], [0], [1], [0, 0, 1, 1], [], []>} : vector<4x128xf32>, vector<128x128xf32>, vector<4x128xf32> -> vector<4x128xf32>
    %152 = arith.addf %150, %151 : vector<4x128xf32>
    %153 = arith.addf %152, %4 : vector<4x128xf32>
    %c0_100 = arith.constant 0 : index
    %c0_101 = arith.constant 0 : index
    %c3_102 = arith.constant 3 : index
    %c0_103 = arith.constant 0 : index
    %c0_104 = arith.constant 0 : index
    %154 = vector.load %arg8[%c0_100, %c0_101, %c3_102, %c0_103, %c0_104] : memref<1x1x4x4x128xf32, #tpu.memory_space<vmem>>, vector<1x1x1x4x128xf32>
    %155 = vector.shape_cast %154 : vector<1x1x1x4x128xf32> to vector<4x128xf32>
    %156 = vector.shape_cast %153 : vector<4x128xf32> to vector<1x1x1x4x128xf32>
    tpu.vector_store %arg8[%c0_100, %c0_101, %c3_102, %c0_103, %c0_104], %156 {strides = array<i32>} : memref<1x1x4x4x128xf32, #tpu.memory_space<vmem>>, vector<1x1x1x4x128xf32>,
    return
  }
  func.func @transform_0(%arg0: i32, %arg1: i32, %arg2: i32) -> (i32, i32, i32, i32, i32, i32) {
    %c2_i32 = arith.constant 2 : i32
    %0 = arith.muli %c2_i32, %arg1 : i32
    %c0_i32 = arith.constant 0 : i32
    %c0_i32_0 = arith.constant 0 : i32
    %c0_i32_1 = arith.constant 0 : i32
    %c0_i32_2 = arith.constant 0 : i32
    return %arg0, %0, %arg2, %c0_i32, %c0_i32_0, %c0_i32_1 : i32, i32, i32, i32, i32, i32
  }
  func.func @transform_1(%arg0: i32, %arg1: i32, %arg2: i32) -> (i32, i32, i32, i32, i32, i32) {
    %c2_i32 = arith.constant 2 : i32
    %0 = arith.muli %c2_i32, %arg1 : i32
    %c1_i32 = arith.constant 1 : i32
    %1 = arith.addi %0, %c1_i32 : i32
    %c1_i32_0 = arith.constant 1 : i32
    %c0_i32 = arith.constant 0 : i32
    %c0_i32_1 = arith.constant 0 : i32
    %c0_i32_2 = arith.constant 0 : i32
    return %arg0, %1, %arg2, %c1_i32_0, %c0_i32, %c0_i32_1 : i32, i32, i32, i32, i32, i32
  }
  func.func @transform_2(%arg0: i32, %arg1: i32, %arg2: i32) -> (i32, i32) {
    %c0_i32 = arith.constant 0 : i32
    %c0_i32_0 = arith.constant 0 : i32
    %c0_i32_1 = arith.constant 0 : i32
    return %c0_i32, %c0_i32_0 : i32, i32
  }
  func.func @transform_3(%arg0: i32, %arg1: i32, %arg2: i32) -> (i32, i32) {
    %c0_i32 = arith.constant 0 : i32
    %c0_i32_0 = arith.constant 0 : i32
    %c0_i32_1 = arith.constant 0 : i32
    return %c0_i32, %c0_i32_0 : i32, i32
  }
  func.func @transform_4(%arg0: i32, %arg1: i32, %arg2: i32) -> (i32, i32) {
    %c0_i32 = arith.constant 0 : i32
    %c0_i32_0 = arith.constant 0 : i32
    %c0_i32_1 = arith.constant 0 : i32
    return %c0_i32, %c0_i32_0 : i32, i32
  }
  func.func @transform_5(%arg0: i32, %arg1: i32, %arg2: i32) -> (i32, i32, i32, i32, i32) {
    %c0_i32 = arith.constant 0 : i32
    %c0_i32_0 = arith.constant 0 : i32
    %c0_i32_1 = arith.constant 0 : i32
    return %arg0, %arg1, %arg2, %c0_i32, %c0_i32_0 : i32, i32, i32, i32, i32
  }
}

</mosaic_0001>

<llo_original>
// kernel: tpu_custom_call.1
$region0: #{tpu_custom_call.1}
  #allocation0 [shape = 'u32[]', space=smem, size = 0x4, offset = 0x4, fixed_abs, tag = 'smem constant byte address 0x4 - core index']
  #allocation1 [shape = 'u32[144,128]{1,0:T(1,128)}', space=vmem, size = 0x12000, scoped, tag = 'internal scratch']
  %s0 = inlined_call_operand.hbm [shape: f32[2,8,4,2,4,128], index: 0, kind: input, shape index: {}]
  %s1 = inlined_call_operand.hbm [shape: f32[2,8,4,2,4,128], index: 1, kind: input, shape index: {}]
  %s2 = inlined_call_operand.hbm [shape: f32[128,128], index: 2, kind: input, shape index: {}]
  %s3 = inlined_call_operand.hbm [shape: f32[128,128], index: 3, kind: input, shape index: {}]
  %s4 = inlined_call_operand.vmem [shape: f32[1,128], index: 4, kind: input, shape index: {}]
  %s5 = inlined_call_operand.hbm [shape: f32[2,4,4,4,128], index: 5, kind: output, shape index: {}]
  %s6 = sld [smem:[#allocation0]]
  $region69: #{tpu_custom_call.1} parent=0
    _
  %s8 = ssub.s32 1, %s6
  %s9 = scalar_select 0, %s8, %s6
  $region1: #{tpu_custom_call.1} parent=0
    #allocation2 [shape = 'u8[16384]{0}', space=vmem, size = 0x4000, scoped, tag = 'input window, operand 0']
    #allocation3 [shape = 's32[2]{0}', space=sflag, size = 0x8, scoped, tag = 'scoped memory for tpu_custom_call.1']
    #allocation4 [shape = 's32[2]{0}', space=sflag, size = 0x8, scoped, tag = 'scoped memory for tpu_custom_call.1']
    #allocation5 [shape = 'u8[16384]{0}', space=vmem, size = 0x4000, scoped, tag = 'input window, operand 1']
    #allocation6 [shape = 's32[2]{0}', space=sflag, size = 0x8, scoped, tag = 'scoped memory for tpu_custom_call.1']
    #allocation7 [shape = 'u8[65536]{0}', space=vmem, size = 0x10000, scoped, tag = 'input window, operand 2, single buffered']
    #allocation8 [shape = 'u8[65536]{0}', space=vmem, size = 0x10000, scoped, tag = 'input window, operand 3, single buffered']
    #allocation9 [shape = 's32[1]{0}', space=sflag, size = 0x4, scoped, tag = 'scoped memory for tpu_custom_call.1']
    #allocation10 [shape = 'u8[16384]{0}', space=vmem, size = 0x4000, scoped, tag = 'output window, operand 0']
    %10 = vsyncpa [#allocation3], 0
    %s11 = scalar_lea.sflag [#allocation3], 1
    %12 = vsyncpa %s11, 0
    %13 = vsyncpa [#allocation6], 0
    %s14 = scalar_lea.sflag [#allocation6], 1
    %15 = vsyncpa %s14, 0
    %16 = vsyncpa [#allocation9], 0
    %17 = vsyncpa [#allocation4], 0
    %s18 = scalar_lea.sflag [#allocation4], 1
    %19 = vsyncpa %s18, 0
    loop: start=0, step=1, limit=10
    $region2: #{tpu_custom_call.1} parent=1 // loop_pre_header
      _
    $region3: #{tpu_custom_call.1} parent=1 // loop_header
      %s21 = sphi 0, %s25
      %p22 = scmp.ge.s32.totalorder %s21, 10
      %s28 = sphi 0, %s47
      %s29 = sphi 0, %s43
      %s30 = sphi 0, %s39
      %s31 = sphi 0, %s28
      %s32 = sphi 0, %s29
      %s33 = sphi 0, %s30
      %s34 = sphi 0, %s31
      %s35 = sphi 0, %s32
      %s36 = sphi 0, %s33
      %s56 = sphi 0, %s58
      %s59 = sphi 0, %s56
      %s60 = sphi 0, %s59
      %s76 = sphi 0, %s60
      %s90 = sphi 0, %s92
      %s93 = sphi 0, %s90
      %s94 = sphi 0, %s93
      %s110 = sphi 0, %s94
      %s114 = sphi 0, %s114
      %s116 = sphi 0, %s114
      %s117 = sphi 0, %s116
      %s131 = sphi 0, %s117
      %s135 = sphi 0, %s135
      %s137 = sphi 0, %s135
      %s138 = sphi 0, %s137
      %s152 = sphi 0, %s138
      %s156 = sphi 0, %s156
      %s158 = sphi 0, %s156
      %s159 = sphi 0, %s158
      %s173 = sphi 0, %s159
      %s183 = sphi 0, %s185
      %s186 = sphi 0, %s183
      %s187 = sphi 0, %s186
      %s203 = sphi 0, %s187
    $region4: #{tpu_custom_call.1} parent=1 // loop_header_branch
      %24 = sbr.rel (%p22) target = $region8
    $region5: #{tpu_custom_call.1} parent=1 // loop_body
      %s26 = ssub.s32 %s21, 1
      %s27 = ssub.s32 %s21, 2
      %s37 = sadd.s32 1, %s30
      %p38 = scmp.ge.s32.totalorder %s37, 1
      %s39 = scalar_select %p38, 0, %s37
      %s40 = sadd.s32 1, %s29
      %s41 = scalar_select %p38, %s40, %s29
      %p42 = scmp.ge.s32.totalorder %s41, 4
      %s43 = scalar_select %p42, 0, %s41
      %s44 = sadd.s32 1, %s28
      %s45 = scalar_select %p42, %s44, %s28
      %p46 = scmp.ge.s32.totalorder %s45, 2
      %s47 = scalar_select %p46, 0, %s45
      %s48 = smul.u32 %s29, 2
      %s49 = smul.u32 %s43, 2
      %s50 = ssub.s32 %s28, %s47
      %s51 = ssub.s32 %s48, %s49
      %s52 = sor.u32 %s50, %s51
      %s53 = ssub.s32 %s30, %s39
      %s54 = sor.u32 %s52, %s53
      %p55 = scmp.eq.s32.totalorder %s54, 0
      %s57 = sadd.s32 %s56, 1
      %s58 = scalar_select %p55, %s56, %s57
      %p61 = pneg %p55
      %p62 = scmp.eq.s32.totalorder %s21, 7
      %p63 = por %p61, %p62
      %p64 = scmp.ne.s32.totalorder %s56, %s59
      %p65 = scmp.eq.s32.totalorder %s21, 0
      %p66 = por %p64, %p65
      %p67 = scmp.ne.s32.totalorder %s56, %s59
      %p68 = scmp.eq.s32.totalorder %s26, 7
      %p69 = por %p67, %p68
      %p70 = scmp.ne.s32.totalorder %s59, %s60
      %p71 = scmp.eq.s32.totalorder %s26, 0
      %p72 = por %p70, %p71
      %p73 = scmp.ne.s32.totalorder %s59, %s60
      %p74 = scmp.eq.s32.totalorder %s27, 7
      %p75 = por %p73, %p74
      %p77 = scmp.ne.s32.totalorder %s60, %s76
      %p78 = scmp.eq.s32.totalorder %s27, 0
      %p79 = por %p77, %p78
      %s80 = smul.u32 %s29, 2
      %s81 = sadd.s32 %s80, 1
      %s82 = smul.u32 %s43, 2
      %s83 = sadd.s32 %s82, 1
      %s84 = ssub.s32 %s28, %s47
      %s85 = ssub.s32 %s81, %s83
      %s86 = sor.u32 %s84, %s85
      %s87 = ssub.s32 %s30, %s39
      %s88 = sor.u32 %s86, %s87
      %p89 = scmp.eq.s32.totalorder %s88, 0
      %s91 = sadd.s32 %s90, 1
      %s92 = scalar_select %p89, %s90, %s91
      %p95 = pneg %p89
      %p96 = scmp.eq.s32.totalorder %s21, 7
      %p97 = por %p95, %p96
      %p98 = scmp.ne.s32.totalorder %s90, %s93
      %p99 = scmp.eq.s32.totalorder %s21, 0
      %p100 = por %p98, %p99
      %p101 = scmp.ne.s32.totalorder %s90, %s93
      %p102 = scmp.eq.s32.totalorder %s26, 7
      %p103 = por %p101, %p102
      %p104 = scmp.ne.s32.totalorder %s93, %s94
      %p105 = scmp.eq.s32.totalorder %s26, 0
      %p106 = por %p104, %p105
      %p107 = scmp.ne.s32.totalorder %s93, %s94
      %p108 = scmp.eq.s32.totalorder %s27, 7
      %p109 = por %p107, %p108
      %p111 = scmp.ne.s32.totalorder %s94, %s110
      %p112 = scmp.eq.s32.totalorder %s27, 0
      %p113 = por %p111, %p112
      %s115 = sadd.s32 %s114, 1
      %p118 = scmp.eq.s32.totalorder %s21, 7
      %p119 = scmp.ne.s32.totalorder %s114, %s116
      %p120 = scmp.eq.s32.totalorder %s21, 0
      %p121 = por %p119, %p120
      %p122 = scmp.ne.s32.totalorder %s114, %s116
      %p123 = scmp.eq.s32.totalorder %s26, 7
      %p124 = por %p122, %p123
      %p125 = scmp.ne.s32.totalorder %s116, %s117
      %p126 = scmp.eq.s32.totalorder %s26, 0
      %p127 = por %p125, %p126
      %p128 = scmp.ne.s32.totalorder %s116, %s117
      %p129 = scmp.eq.s32.totalorder %s27, 7
      %p130 = por %p128, %p129
      %p132 = scmp.ne.s32.totalorder %s117, %s131
      %p133 = scmp.eq.s32.totalorder %s27, 0
      %p134 = por %p132, %p133
      %s136 = sadd.s32 %s135, 1
      %p139 = scmp.eq.s32.totalorder %s21, 7
      %p140 = scmp.ne.s32.totalorder %s135, %s137
      %p141 = scmp.eq.s32.totalorder %s21, 0
      %p142 = por %p140, %p141
      %p143 = scmp.ne.s32.totalorder %s135, %s137
      %p144 = scmp.eq.s32.totalorder %s26, 7
      %p145 = por %p143, %p144
      %p146 = scmp.ne.s32.totalorder %s137, %s138
      %p147 = scmp.eq.s32.totalorder %s26, 0
      %p148 = por %p146, %p147
      %p149 = scmp.ne.s32.totalorder %s137, %s138
      %p150 = scmp.eq.s32.totalorder %s27, 7
      %p151 = por %p149, %p150
      %p153 = scmp.ne.s32.totalorder %s138, %s152
      %p154 = scmp.eq.s32.totalorder %s27, 0
      %p155 = por %p153, %p154
      %s157 = sadd.s32 %s156, 1
      %p160 = scmp.eq.s32.totalorder %s21, 7
      %p161 = scmp.ne.s32.totalorder %s156, %s158
      %p162 = scmp.eq.s32.totalorder %s21, 0
      %p163 = por %p161, %p162
      %p164 = scmp.ne.s32.totalorder %s156, %s158
      %p165 = scmp.eq.s32.totalorder %s26, 7
      %p166 = por %p164, %p165
      %p167 = scmp.ne.s32.totalorder %s158, %s159
      %p168 = scmp.eq.s32.totalorder %s26, 0
      %p169 = por %p167, %p168
      %p170 = scmp.ne.s32.totalorder %s158, %s159
      %p171 = scmp.eq.s32.totalorder %s27, 7
      %p172 = por %p170, %p171
      %p174 = scmp.ne.s32.totalorder %s159, %s173
      %p175 = scmp.eq.s32.totalorder %s27, 0
      %p176 = por %p174, %p175
      %s177 = ssub.s32 %s28, %s47
      %s178 = ssub.s32 %s29, %s43
      %s179 = sor.u32 %s177, %s178
      %s180 = ssub.s32 %s30, %s39
      %s181 = sor.u32 %s179, %s180
      %p182 = scmp.eq.s32.totalorder %s181, 0
      %s184 = sadd.s32 %s183, 1
      %s185 = scalar_select %p182, %s183, %s184
      %p188 = pneg %p182
      %p189 = scmp.eq.s32.totalorder %s21, 7
      %p190 = por %p188, %p189
      %p191 = scmp.ne.s32.totalorder %s183, %s186
      %p192 = scmp.eq.s32.totalorder %s21, 0
      %p193 = por %p191, %p192
      %p194 = scmp.ne.s32.totalorder %s183, %s186
      %p195 = scmp.eq.s32.totalorder %s26, 7
      %p196 = por %p194, %p195
      %p197 = scmp.ne.s32.totalorder %s186, %s187
      %p198 = scmp.eq.s32.totalorder %s26, 0
      %p199 = por %p197, %p198
      %p200 = scmp.ne.s32.totalorder %s186, %s187
      %p201 = scmp.eq.s32.totalorder %s27, 7
      %p202 = por %p200, %p201
      %p204 = scmp.ne.s32.totalorder %s187, %s203
      %p205 = scmp.eq.s32.totalorder %s27, 0
      %p206 = por %p204, %p205
      %p207 = scmp.le.s32.totalorder 1, %s21
      %p208 = scmp.lt.s32.totalorder %s21, 9
      %p209 = pnand %p207, %p208
      %p210 = pneg %p209
      // Predicated region
      $region9: #{tpu_custom_call.1} parent=5 // pred_check
        _
      $region10: #{tpu_custom_call.1} parent=5 // pred_check_branch
        %212 = sbr.rel (%p209) target = $region12
      $region11: #{tpu_custom_call.1} parent=5 // pred_region
        %s213 = ssub.s32 %s21, 1
        // Predicated region
        $region13: #{tpu_custom_call.1} parent=11 // pred_check
          %p214 = pneg %p127
        $region14: #{tpu_custom_call.1} parent=11 // pred_check_branch
          %216 = sbr.rel (%p214) target = $region16
        $region15: #{tpu_custom_call.1} parent=11 // pred_region
          %s218 = ssub.s32 2048, 2048
          %219 = vsyncadd [#allocation6], %s218
          %s220 = sshll.u32 [#allocation7], 4
          %s221 = int_to_ptr.vmem [resolvable:$true] %s220
          %226 = dma.hbm_to_vmem [thread:$0]  %s2, 2048, %s221, [#allocation6], 128, 128, 8
        $region16: #{tpu_custom_call.1} parent=11 // pred_fallthru
          _
        // Predicated region
        $region17: #{tpu_custom_call.1} parent=11 // pred_check
          %p227 = pneg %p148
        $region18: #{tpu_custom_call.1} parent=11 // pred_check_branch
          %229 = sbr.rel (%p227) target = $region20
        $region19: #{tpu_custom_call.1} parent=11 // pred_region
          %s231 = ssub.s32 2048, 2048
          %232 = vsyncadd [#allocation9], %s231
          %s233 = sshll.u32 [#allocation8], 4
          %s234 = int_to_ptr.vmem [resolvable:$true] %s233
          %239 = dma.hbm_to_vmem [thread:$0]  %s3, 2048, %s234, [#allocation9], 128, 128, 8
        $region20: #{tpu_custom_call.1} parent=11 // pred_fallthru
          _
        // Predicated region
        $region21: #{tpu_custom_call.1} parent=11 // pred_check
          %p240 = pneg %p169
        $region22: #{tpu_custom_call.1} parent=11 // pred_check_branch
          %242 = sbr.rel (%p240) target = $region24
        $region23: #{tpu_custom_call.1} parent=11 // pred_region
          _
        $region24: #{tpu_custom_call.1} parent=11 // pred_fallthru
          _
      $region12: #{tpu_custom_call.1} parent=5 // pred_fallthru
        _
      %p243 = scmp.lt.s32.totalorder %s21, 8
      // Predicated region
      $region25: #{tpu_custom_call.1} parent=5 // pred_check
        %p244 = pneg %p243
      $region26: #{tpu_custom_call.1} parent=5 // pred_check_branch
        %246 = sbr.rel (%p244) target = $region28
      $region27: #{tpu_custom_call.1} parent=5 // pred_region
        // Predicated region
        $region29: #{tpu_custom_call.1} parent=27 // pred_check
          %p247 = pneg %p66
        $region30: #{tpu_custom_call.1} parent=27 // pred_check_branch
          %249 = sbr.rel (%p247) target = $region32
        $region31: #{tpu_custom_call.1} parent=27 // pred_region
          %s250 = sand.u32 %s56, 1
          %s251 = scalar_lea.sflag [#allocation3], %s250
          %s252 = sand.u32 %s56, 1
          %s253 = smul.addr %s252, 16
          %s254 = scalar_lea.vmem [#allocation2], %s253
          %s255 = smul.u32 %s29, 2
          %s256 = smul.u32 4, %s30
          %s258 = ssub.s32 256, 256
          %259 = vsyncadd %s251, %s258
          %s260 = smul.addr %s256, 2
          %s261 = smul.addr %s255, 8
          %s262 = sadd.s32 %s260, %s261
          %s263 = smul.addr %s28, 64
          %s264 = sadd.s32 %s262, %s263
          %s265 = smul.addr %s264, 64
          %s266 = scalar_lea.hbm %s0, %s265
          %s267 = sshll.u32 %s254, 4
          %s268 = int_to_ptr.vmem [resolvable:$true] %s267
          %273 = dma.hbm_to_vmem [thread:$0]  %s266, 256, %s268, %s251, 128, 64, 4
        $region32: #{tpu_custom_call.1} parent=27 // pred_fallthru
          _
        // Predicated region
        $region33: #{tpu_custom_call.1} parent=27 // pred_check
          %p274 = pneg %p100
        $region34: #{tpu_custom_call.1} parent=27 // pred_check_branch
          %276 = sbr.rel (%p274) target = $region36
        $region35: #{tpu_custom_call.1} parent=27 // pred_region
          %s277 = sand.u32 %s21, 1
          %s278 = scalar_lea.sflag [#allocation6], %s277
          %s279 = sand.u32 %s90, 1
          %s280 = smul.addr %s279, 16
          %s281 = scalar_lea.vmem [#allocation5], %s280
          %s282 = smul.u32 %s29, 2
          %s283 = sadd.s32 %s282, 1
          %s284 = smul.u32 4, %s30
          %s286 = ssub.s32 256, 256
          %287 = vsyncadd %s278, %s286
          %s288 = smul.addr %s284, 2
          %s289 = sadd.s32 1, %s288
          %s290 = smul.addr %s283, 8
          %s291 = sadd.s32 %s289, %s290
          %s292 = smul.addr %s28, 64
          %s293 = sadd.s32 %s291, %s292
          %s294 = smul.addr %s293, 64
          %s295 = scalar_lea.hbm %s1, %s294
          %s296 = sshll.u32 %s281, 4
          %s297 = int_to_ptr.vmem [resolvable:$true] %s296
          %302 = dma.hbm_to_vmem [thread:$0]  %s295, 256, %s297, %s278, 128, 64, 4
        $region36: #{tpu_custom_call.1} parent=27 // pred_fallthru
          _
      $region28: #{tpu_custom_call.1} parent=5 // pred_fallthru
        _
      %p303 = scmp.le.s32.totalorder 1, %s21
      %p304 = scmp.lt.s32.totalorder %s21, 9
      %p305 = pnand %p303, %p304
      %p306 = pneg %p305
      // Predicated region
      $region37: #{tpu_custom_call.1} parent=5 // pred_check
        _
      $region38: #{tpu_custom_call.1} parent=5 // pred_check_branch
        %308 = sbr.rel (%p305) target = $region40
      $region39: #{tpu_custom_call.1} parent=5 // pred_region
        %s309 = ssub.s32 %s21, 1
        %s310 = sand.u32 %s59, 1
        %s311 = scalar_lea.sflag [#allocation3], %s310
        %s312 = sand.u32 %s59, 1
        %s313 = smul.addr %s312, 16
        %s314 = scalar_lea.vmem [#allocation2], %s313
        // Predicated region
        $region41: #{tpu_custom_call.1} parent=39 // pred_check
          %p315 = pneg %p72
        $region42: #{tpu_custom_call.1} parent=39 // pred_check_branch
          %317 = sbr.rel (%p315) target = $region44
        $region43: #{tpu_custom_call.1} parent=39 // pred_region
          %318 = dma.done %s311, 256
        $region44: #{tpu_custom_call.1} parent=39 // pred_fallthru
          _
        %s319 = sand.u32 %s26, 1
        %s320 = scalar_lea.sflag [#allocation6], %s319
        %s321 = sand.u32 %s93, 1
        %s322 = smul.addr %s321, 16
        %s323 = scalar_lea.vmem [#allocation5], %s322
        // Predicated region
        $region45: #{tpu_custom_call.1} parent=39 // pred_check
          %p324 = pneg %p106
        $region46: #{tpu_custom_call.1} parent=39 // pred_check_branch
          %326 = sbr.rel (%p324) target = $region48
        $region47: #{tpu_custom_call.1} parent=39 // pred_region
          %327 = dma.done %s320, 256
        $region48: #{tpu_custom_call.1} parent=39 // pred_fallthru
          _
        // Predicated region
        $region49: #{tpu_custom_call.1} parent=39 // pred_check
          %p328 = pneg %p127
        $region50: #{tpu_custom_call.1} parent=39 // pred_check_branch
          %330 = sbr.rel (%p328) target = $region52
        $region51: #{tpu_custom_call.1} parent=39 // pred_region
          %331 = dma.done [#allocation6], 2048
        $region52: #{tpu_custom_call.1} parent=39 // pred_fallthru
          _
        // Predicated region
        $region53: #{tpu_custom_call.1} parent=39 // pred_check
          %p332 = pneg %p148
        $region54: #{tpu_custom_call.1} parent=39 // pred_check_branch
          %334 = sbr.rel (%p332) target = $region56
        $region55: #{tpu_custom_call.1} parent=39 // pred_region
          %335 = dma.done [#allocation9], 2048
        $region56: #{tpu_custom_call.1} parent=39 // pred_fallthru
          _
        %s336 = sand.u32 %s59, 1
        %s337 = scalar_lea.sflag [#allocation3], %s336
        %s338 = sand.u32 %s59, 1
        %s339 = smul.addr %s338, 16
        %s340 = scalar_lea.vmem [#allocation2], %s339
        %p341 = pneg %p72
        %p342 = pneg %p69
        %s343 = sand.u32 %s26, 1
        %s344 = scalar_lea.sflag [#allocation6], %s343
        %s345 = sand.u32 %s93, 1
        %s346 = smul.addr %s345, 16
        %s347 = scalar_lea.vmem [#allocation5], %s346
        %p348 = pneg %p106
        %p349 = pneg %p103
        %p350 = pneg %p127
        %p351 = pneg %p124
        %p352 = pneg %p148
        %p353 = pneg %p145
        %p354 = pneg %p169
        %p355 = pneg %p166
        %p356 = pneg %p199
        %p357 = pneg %p196
        %s358 = sand.u32 %s186, 1
        %s359 = scalar_lea.sflag [#allocation4], %s358
        %s360 = sand.u32 %s186, 1
        %s361 = smul.addr %s360, 16
        %s362 = scalar_lea.vmem [#allocation10], %s361
        %s363 = smul.u32 %s32, 2
        %s364 = smul.u32 4, %s33
        %s365 = smul.u32 %s32, 2
        %s366 = sadd.s32 %s365, 1
        %s367 = smul.u32 4, %s33
        %s368 = smul.u32 4, %s33
        %v369 = vld [vmem:[#allocation7] sm:$0xff]
        %v370 = vld [vmem:[#allocation7 + $0x8] sm:$0xff]
        %v371 = vld [vmem:[#allocation7 + $0x10] sm:$0xff]
        %v372 = vld [vmem:[#allocation7 + $0x18] sm:$0xff]
        %v373 = vld [vmem:[#allocation7 + $0x20] sm:$0xff]
        %v374 = vld [vmem:[#allocation7 + $0x28] sm:$0xff]
        %v375 = vld [vmem:[#allocation7 + $0x30] sm:$0xff]
        %v376 = vld [vmem:[#allocation7 + $0x38] sm:$0xff]
        %v377 = vld [vmem:[#allocation7 + $0x40] sm:$0xff]
        %v378 = vld [vmem:[#allocation7 + $0x48] sm:$0xff]
        %v379 = vld [vmem:[#allocation7 + $0x50] sm:$0xff]
        %v380 = vld [vmem:[#allocation7 + $0x58] sm:$0xff]
        %v381 = vld [vmem:[#allocation7 + $0x60] sm:$0xff]
        %v382 = vld [vmem:[#allocation7 + $0x68] sm:$0xff]
        %v383 = vld [vmem:[#allocation7 + $0x70] sm:$0xff]
        %v384 = vld [vmem:[#allocation7 + $0x78] sm:$0xff]
        %v385 = vld [vmem:[#allocation8] sm:$0xff]
        %v386 = vld [vmem:[#allocation8 + $0x8] sm:$0xff]
        %v387 = vld [vmem:[#allocation8 + $0x10] sm:$0xff]
        %v388 = vld [vmem:[#allocation8 + $0x18] sm:$0xff]
        %v389 = vld [vmem:[#allocation8 + $0x20] sm:$0xff]
        %v390 = vld [vmem:[#allocation8 + $0x28] sm:$0xff]
        %v391 = vld [vmem:[#allocation8 + $0x30] sm:$0xff]
        %v392 = vld [vmem:[#allocation8 + $0x38] sm:$0xff]
        %v393 = vld [vmem:[#allocation8 + $0x40] sm:$0xff]
        %v394 = vld [vmem:[#allocation8 + $0x48] sm:$0xff]
        %v395 = vld [vmem:[#allocation8 + $0x50] sm:$0xff]
        %v396 = vld [vmem:[#allocation8 + $0x58] sm:$0xff]
        %v397 = vld [vmem:[#allocation8 + $0x60] sm:$0xff]
        %v398 = vld [vmem:[#allocation8 + $0x68] sm:$0xff]
        %v399 = vld [vmem:[#allocation8 + $0x70] sm:$0xff]
        %v400 = vld [vmem:[#allocation8 + $0x78] sm:$0xff]
        %v401 = vld [vmem:[%s4] sm:$0x1]
        %v403 = vlaneseq
        %v404 = vshrl.u32 %v403, 7
        %v405 = vsub.s32 0, %v404
        %v406 = vrot.slane %v401, %v405
        %v408 = vld [vmem:[%s314] sm:$0xf]
        %v409 = vld [vmem:[%s323] sm:$0xf]
        %vm410 = vcmask 1043456
        %v411 = vsel %vm410, %v408, 0.0
        %412 = vadd.xlane.f32.xlu0 %v411
        %v413 = vpop.xlane.xlu0 %412
        %v414 = vsel %vm410, %v409, 0.0
        %415 = vadd.xlane.f32.xlu0 %v414
        %v416 = vpop.xlane.xlu0 %415
        %v417 = vadd.f32 %v413, %v416
        %v418 = vmul.f32 %v417, 0.00390625
        %v419 = vsub.f32 %v408, %v418
        %v420 = vsub.f32 %v409, %v418
        %v421 = vmul.f32 %v419, %v419
        %v422 = vsel %vm410, %v421, 0.0
        %423 = vadd.xlane.f32.xlu0 %v422
        %v424 = vpop.xlane.xlu0 %423
        %v425 = vmul.f32 %v420, %v420
        %v426 = vsel %vm410, %v425, 0.0
        %427 = vadd.xlane.f32.xlu0 %v426
        %v428 = vpop.xlane.xlu0 %427
        %v429 = vadd.f32 %v424, %v428
        %v430 = vmul.f32 %v429, 0.00390625
        %v431 = vadd.f32 %v430, 1e-05
        %v432 = vrsqrt.pop %v431
        %v433 = vmul.f32 %v419, %v432
        %v434 = vmul.f32 %v420, %v432
        %435 = vmatprep.subr.mxu0 0.0
        %436 = vmatpush1.msra.mxu0 %v385
        %437 = vmatprep.subr.mxu0 0.0
        %438 = vmatpush1.msra.mxu0 %v386
        %439 = vmatprep.subr.mxu0 0.0
        %440 = vmatpush1.msra.mxu0 %v387
        %441 = vmatprep.subr.mxu0 0.0
        %442 = vmatpush1.msra.mxu0 %v388
        %443 = vmatprep.subr.mxu0 0.0
        %444 = vmatpush1.msra.mxu0 %v389
        %445 = vmatprep.subr.mxu0 0.0
        %446 = vmatpush1.msra.mxu0 %v390
        %447 = vmatprep.subr.mxu0 0.0
        %448 = vmatpush1.msra.mxu0 %v391
        %449 = vmatprep.subr.mxu0 0.0
        %450 = vmatpush1.msra.mxu0 %v392
        %451 = vmatprep.subr.mxu0 0.0
        %452 = vmatpush1.msra.mxu0 %v393
        %453 = vmatprep.subr.mxu0 0.0
        %454 = vmatpush1.msra.mxu0 %v394
        %455 = vmatprep.subr.mxu0 0.0
        %456 = vmatpush1.msra.mxu0 %v395
        %457 = vmatprep.subr.mxu0 0.0
        %458 = vmatpush1.msra.mxu0 %v396
        %459 = vmatprep.subr.mxu0 0.0
        %460 = vmatpush1.msra.mxu0 %v397
        %461 = vmatprep.subr.mxu0 0.0
        %462 = vmatpush1.msra.mxu0 %v398
        %463 = vmatprep.subr.mxu0 0.0
        %464 = vmatpush1.msra.mxu0 %v399
        %465 = vmatprep.subr.mxu0 0.0
        %466 = vmatpush1.msra.mxu0 %v400
        %467 = vmatprep.subr.mxu0 0.0
        %468 = vmatpush1.msra.mxu0 0.0
        %469 = vmatprep.subr.mxu0 0.0
        %470 = vmatpush1.msra.mxu0 0.0
        %471 = vmatprep.subr.mxu0 0.0
        %472 = vmatpush1.msra.mxu0 0.0
        %473 = vmatprep.subr.mxu0 0.0
        %474 = vmatpush1.msra.mxu0 0.0
        %475 = vmatprep.subr.mxu0 0.0
        %476 = vmatpush1.msra.mxu0 0.0
        %477 = vmatprep.subr.mxu0 0.0
        %478 = vmatpush1.msra.mxu0 0.0
        %479 = vmatprep.subr.mxu0 0.0
        %480 = vmatpush1.msra.mxu0 0.0
        %481 = vmatprep.subr.mxu0 0.0
        %482 = vmatpush1.msra.mxu0 0.0
        %483 = vmatprep.subr.mxu0 0.0
        %484 = vmatpush1.msra.mxu0 0.0
        %485 = vmatprep.subr.mxu0 0.0
        %486 = vmatpush1.msra.mxu0 0.0
        %487 = vmatprep.subr.mxu0 0.0
        %488 = vmatpush1.msra.mxu0 0.0
        %489 = vmatprep.subr.mxu0 0.0
        %490 = vmatpush1.msra.mxu0 0.0
        %491 = vmatprep.subr.mxu0 0.0
        %492 = vmatpush1.msra.mxu0 0.0
        %493 = vmatprep.subr.mxu0 0.0
        %494 = vmatpush1.msra.mxu0 0.0
        %495 = vmatprep.subr.mxu0 0.0
        %496 = vmatpush1.msra.mxu0 0.0
        %497 = vmatprep.subr.mxu0 0.0
        %498 = vmatpush1.msra.mxu0 0.0
        %499 = vmatprep.mubr.f32.mxu0 0.0
        %500 = vmatmul.mubr.f32.gmra.mrb[0].mxu0 %v434
        %v501 = vpop.f32.mrb[0].mxu0
        %v502 = vadd.f32 0.0, %v501
        %v503 = vpop.f32.mrb[0].mxu0
        %504 = vdwg.mxu0
        %505 = vmatprep.subr.mxu0 0.0
        %506 = vmatpush1.msra.mxu0 %v369
        %507 = vmatprep.subr.mxu0 0.0
        %508 = vmatpush1.msra.mxu0 %v370
        %509 = vmatprep.subr.mxu0 0.0
        %510 = vmatpush1.msra.mxu0 %v371
        %511 = vmatprep.subr.mxu0 0.0
        %512 = vmatpush1.msra.mxu0 %v372
        %513 = vmatprep.subr.mxu0 0.0
        %514 = vmatpush1.msra.mxu0 %v373
        %515 = vmatprep.subr.mxu0 0.0
        %516 = vmatpush1.msra.mxu0 %v374
        %517 = vmatprep.subr.mxu0 0.0
        %518 = vmatpush1.msra.mxu0 %v375
        %519 = vmatprep.subr.mxu0 0.0
        %520 = vmatpush1.msra.mxu0 %v376
        %521 = vmatprep.subr.mxu0 0.0
        %522 = vmatpush1.msra.mxu0 %v377
        %523 = vmatprep.subr.mxu0 0.0
        %524 = vmatpush1.msra.mxu0 %v378
        %525 = vmatprep.subr.mxu0 0.0
        %526 = vmatpush1.msra.mxu0 %v379
        %527 = vmatprep.subr.mxu0 0.0
        %528 = vmatpush1.msra.mxu0 %v380
        %529 = vmatprep.subr.mxu0 0.0
        %530 = vmatpush1.msra.mxu0 %v381
        %531 = vmatprep.subr.mxu0 0.0
        %532 = vmatpush1.msra.mxu0 %v382
        %533 = vmatprep.subr.mxu0 0.0
        %534 = vmatpush1.msra.mxu0 %v383
        %535 = vmatprep.subr.mxu0 0.0
        %536 = vmatpush1.msra.mxu0 %v384
        %537 = vmatprep.subr.mxu0 0.0
        %538 = vmatpush1.msra.mxu0 0.0
        %539 = vmatprep.subr.mxu0 0.0
        %540 = vmatpush1.msra.mxu0 0.0
        %541 = vmatprep.subr.mxu0 0.0
        %542 = vmatpush1.msra.mxu0 0.0
        %543 = vmatprep.subr.mxu0 0.0
        %544 = vmatpush1.msra.mxu0 0.0
        %545 = vmatprep.subr.mxu0 0.0
        %546 = vmatpush1.msra.mxu0 0.0
        %547 = vmatprep.subr.mxu0 0.0
        %548 = vmatpush1.msra.mxu0 0.0
        %549 = vmatprep.subr.mxu0 0.0
        %550 = vmatpush1.msra.mxu0 0.0
        %551 = vmatprep.subr.mxu0 0.0
        %552 = vmatpush1.msra.mxu0 0.0
        %553 = vmatprep.subr.mxu0 0.0
        %554 = vmatpush1.msra.mxu0 0.0
        %555 = vmatprep.subr.mxu0 0.0
        %556 = vmatpush1.msra.mxu0 0.0
        %557 = vmatprep.subr.mxu0 0.0
        %558 = vmatpush1.msra.mxu0 0.0
        %559 = vmatprep.subr.mxu0 0.0
        %560 = vmatpush1.msra.mxu0 0.0
        %561 = vmatprep.subr.mxu0 0.0
        %562 = vmatpush1.msra.mxu0 0.0
        %563 = vmatprep.subr.mxu0 0.0
        %564 = vmatpush1.msra.mxu0 0.0
        %565 = vmatprep.subr.mxu0 0.0
        %566 = vmatpush1.msra.mxu0 0.0
        %567 = vmatprep.subr.mxu0 0.0
        %568 = vmatpush1.msra.mxu0 0.0
        %569 = vmatprep.mubr.f32.mxu0 0.0
        %570 = vmatmul.mubr.f32.gmra.mrb[0].mxu0 %v433
        %v571 = vpop.f32.mrb[0].mxu0
        %v572 = vadd.f32 %v502, %v571
        %v573 = vpop.f32.mrb[0].mxu0
        %574 = vdwg.mxu0
        %v575 = vadd.f32 %v572, %v406
        %576 = vst [vmem:[%s362] sm:$0xf] %v575
        %s577 = scalar_lea.vmem %s314, 4 [#allocation2]
        %v578 = vld [vmem:[%s577] sm:$0xf]
        %s579 = scalar_lea.vmem %s323, 4 [#allocation5]
        %v580 = vld [vmem:[%s579] sm:$0xf]
        %v581 = vsel %vm410, %v578, 0.0
        %582 = vadd.xlane.f32.xlu0 %v581
        %v583 = vpop.xlane.xlu0 %582
        %v584 = vsel %vm410, %v580, 0.0
        %585 = vadd.xlane.f32.xlu0 %v584
        %v586 = vpop.xlane.xlu0 %585
        %v587 = vadd.f32 %v583, %v586
        %v588 = vmul.f32 %v587, 0.00390625
        %v589 = vsub.f32 %v578, %v588
        %v590 = vsub.f32 %v580, %v588
        %v591 = vmul.f32 %v589, %v589
        %v592 = vsel %vm410, %v591, 0.0
        %593 = vadd.xlane.f32.xlu0 %v592
        %v594 = vpop.xlane.xlu0 %593
        %v595 = vmul.f32 %v590, %v590
        %v596 = vsel %vm410, %v595, 0.0
        %597 = vadd.xlane.f32.xlu0 %v596
        %v598 = vpop.xlane.xlu0 %597
        %v599 = vadd.f32 %v594, %v598
        %v600 = vmul.f32 %v599, 0.00390625
        %v601 = vadd.f32 %v600, 1e-05
        %v602 = vrsqrt.pop %v601
        %v603 = vmul.f32 %v589, %v602
        %v604 = vmul.f32 %v590, %v602
        %605 = vmatprep.subr.mxu0 0.0
        %606 = vmatpush1.msra.mxu0 %v385
        %607 = vmatprep.subr.mxu0 0.0
        %608 = vmatpush1.msra.mxu0 %v386
        %609 = vmatprep.subr.mxu0 0.0
        %610 = vmatpush1.msra.mxu0 %v387
        %611 = vmatprep.subr.mxu0 0.0
        %612 = vmatpush1.msra.mxu0 %v388
        %613 = vmatprep.subr.mxu0 0.0
        %614 = vmatpush1.msra.mxu0 %v389
        %615 = vmatprep.subr.mxu0 0.0
        %616 = vmatpush1.msra.mxu0 %v390
        %617 = vmatprep.subr.mxu0 0.0
        %618 = vmatpush1.msra.mxu0 %v391
        %619 = vmatprep.subr.mxu0 0.0
        %620 = vmatpush1.msra.mxu0 %v392
        %621 = vmatprep.subr.mxu0 0.0
        %622 = vmatpush1.msra.mxu0 %v393
        %623 = vmatprep.subr.mxu0 0.0
        %624 = vmatpush1.msra.mxu0 %v394
        %625 = vmatprep.subr.mxu0 0.0
        %626 = vmatpush1.msra.mxu0 %v395
        %627 = vmatprep.subr.mxu0 0.0
        %628 = vmatpush1.msra.mxu0 %v396
        %629 = vmatprep.subr.mxu0 0.0
        %630 = vmatpush1.msra.mxu0 %v397
        %631 = vmatprep.subr.mxu0 0.0
        %632 = vmatpush1.msra.mxu0 %v398
        %633 = vmatprep.subr.mxu0 0.0
        %634 = vmatpush1.msra.mxu0 %v399
        %635 = vmatprep.subr.mxu0 0.0
        %636 = vmatpush1.msra.mxu0 %v400
        %637 = vmatprep.subr.mxu0 0.0
        %638 = vmatpush1.msra.mxu0 0.0
        %639 = vmatprep.subr.mxu0 0.0
        %640 = vmatpush1.msra.mxu0 0.0
        %641 = vmatprep.subr.mxu0 0.0
        %642 = vmatpush1.msra.mxu0 0.0
        %643 = vmatprep.subr.mxu0 0.0
        %644 = vmatpush1.msra.mxu0 0.0
        %645 = vmatprep.subr.mxu0 0.0
        %646 = vmatpush1.msra.mxu0 0.0
        %647 = vmatprep.subr.mxu0 0.0
        %648 = vmatpush1.msra.mxu0 0.0
        %649 = vmatprep.subr.mxu0 0.0
        %650 = vmatpush1.msra.mxu0 0.0
        %651 = vmatprep.subr.mxu0 0.0
        %652 = vmatpush1.msra.mxu0 0.0
        %653 = vmatprep.subr.mxu0 0.0
        %654 = vmatpush1.msra.mxu0 0.0
        %655 = vmatprep.subr.mxu0 0.0
        %656 = vmatpush1.msra.mxu0 0.0
        %657 = vmatprep.subr.mxu0 0.0
        %658 = vmatpush1.msra.mxu0 0.0
        %659 = vmatprep.subr.mxu0 0.0
        %660 = vmatpush1.msra.mxu0 0.0
        %661 = vmatprep.subr.mxu0 0.0
        %662 = vmatpush1.msra.mxu0 0.0
        %663 = vmatprep.subr.mxu0 0.0
        %664 = vmatpush1.msra.mxu0 0.0
        %665 = vmatprep.subr.mxu0 0.0
        %666 = vmatpush1.msra.mxu0 0.0
        %667 = vmatprep.subr.mxu0 0.0
        %668 = vmatpush1.msra.mxu0 0.0
        %669 = vmatprep.mubr.f32.mxu0 0.0
        %670 = vmatmul.mubr.f32.gmra.mrb[0].mxu0 %v604
        %v671 = vpop.f32.mrb[0].mxu0
        %v672 = vadd.f32 0.0, %v671
        %v673 = vpop.f32.mrb[0].mxu0
        %674 = vdwg.mxu0
        %675 = vmatprep.subr.mxu0 0.0
        %676 = vmatpush1.msra.mxu0 %v369
        %677 = vmatprep.subr.mxu0 0.0
        %678 = vmatpush1.msra.mxu0 %v370
        %679 = vmatprep.subr.mxu0 0.0
        %680 = vmatpush1.msra.mxu0 %v371
        %681 = vmatprep.subr.mxu0 0.0
        %682 = vmatpush1.msra.mxu0 %v372
        %683 = vmatprep.subr.mxu0 0.0
        %684 = vmatpush1.msra.mxu0 %v373
        %685 = vmatprep.subr.mxu0 0.0
        %686 = vmatpush1.msra.mxu0 %v374
        %687 = vmatprep.subr.mxu0 0.0
        %688 = vmatpush1.msra.mxu0 %v375
        %689 = vmatprep.subr.mxu0 0.0
        %690 = vmatpush1.msra.mxu0 %v376
        %691 = vmatprep.subr.mxu0 0.0
        %692 = vmatpush1.msra.mxu0 %v377
        %693 = vmatprep.subr.mxu0 0.0
        %694 = vmatpush1.msra.mxu0 %v378
        %695 = vmatprep.subr.mxu0 0.0
        %696 = vmatpush1.msra.mxu0 %v379
        %697 = vmatprep.subr.mxu0 0.0
        %698 = vmatpush1.msra.mxu0 %v380
        %699 = vmatprep.subr.mxu0 0.0
        %700 = vmatpush1.msra.mxu0 %v381
        %701 = vmatprep.subr.mxu0 0.0
        %702 = vmatpush1.msra.mxu0 %v382
        %703 = vmatprep.subr.mxu0 0.0
        %704 = vmatpush1.msra.mxu0 %v383
        %705 = vmatprep.subr.mxu0 0.0
        %706 = vmatpush1.msra.mxu0 %v384
        %707 = vmatprep.subr.mxu0 0.0
        %708 = vmatpush1.msra.mxu0 0.0
        %709 = vmatprep.subr.mxu0 0.0
        %710 = vmatpush1.msra.mxu0 0.0
        %711 = vmatprep.subr.mxu0 0.0
        %712 = vmatpush1.msra.mxu0 0.0
        %713 = vmatprep.subr.mxu0 0.0
        %714 = vmatpush1.msra.mxu0 0.0
        %715 = vmatprep.subr.mxu0 0.0
        %716 = vmatpush1.msra.mxu0 0.0
        %717 = vmatprep.subr.mxu0 0.0
        %718 = vmatpush1.msra.mxu0 0.0
        %719 = vmatprep.subr.mxu0 0.0
        %720 = vmatpush1.msra.mxu0 0.0
        %721 = vmatprep.subr.mxu0 0.0
        %722 = vmatpush1.msra.mxu0 0.0
        %723 = vmatprep.subr.mxu0 0.0
        %724 = vmatpush1.msra.mxu0 0.0
        %725 = vmatprep.subr.mxu0 0.0
        %726 = vmatpush1.msra.mxu0 0.0
        %727 = vmatprep.subr.mxu0 0.0
        %728 = vmatpush1.msra.mxu0 0.0
        %729 = vmatprep.subr.mxu0 0.0
        %730 = vmatpush1.msra.mxu0 0.0
        %731 = vmatprep.subr.mxu0 0.0
        %732 = vmatpush1.msra.mxu0 0.0
        %733 = vmatprep.subr.mxu0 0.0
        %734 = vmatpush1.msra.mxu0 0.0
        %735 = vmatprep.subr.mxu0 0.0
        %736 = vmatpush1.msra.mxu0 0.0
        %737 = vmatprep.subr.mxu0 0.0
        %738 = vmatpush1.msra.mxu0 0.0
        %739 = vmatprep.mubr.f32.mxu0 0.0
        %740 = vmatmul.mubr.f32.gmra.mrb[0].mxu0 %v603
        %v741 = vpop.f32.mrb[0].mxu0
        %v742 = vadd.f32 %v672, %v741
        %v743 = vpop.f32.mrb[0].mxu0
        %744 = vdwg.mxu0
        %v745 = vadd.f32 %v742, %v406
        %s746 = scalar_lea.vmem %s362, 4 [#allocation10]
        %747 = vst [vmem:[%s746] sm:$0xf] %v745
        %s748 = scalar_lea.vmem %s314, 8 [#allocation2]
        %v749 = vld [vmem:[%s748] sm:$0xf]
        %s750 = scalar_lea.vmem %s323, 8 [#allocation5]
        %v751 = vld [vmem:[%s750] sm:$0xf]
        %v752 = vsel %vm410, %v749, 0.0
        %753 = vadd.xlane.f32.xlu0 %v752
        %v754 = vpop.xlane.xlu0 %753
        %v755 = vsel %vm410, %v751, 0.0
        %756 = vadd.xlane.f32.xlu0 %v755
        %v757 = vpop.xlane.xlu0 %756
        %v758 = vadd.f32 %v754, %v757
        %v759 = vmul.f32 %v758, 0.00390625
        %v760 = vsub.f32 %v749, %v759
        %v761 = vsub.f32 %v751, %v759
        %v762 = vmul.f32 %v760, %v760
        %v763 = vsel %vm410, %v762, 0.0
        %764 = vadd.xlane.f32.xlu0 %v763
        %v765 = vpop.xlane.xlu0 %764
        %v766 = vmul.f32 %v761, %v761
        %v767 = vsel %vm410, %v766, 0.0
        %768 = vadd.xlane.f32.xlu0 %v767
        %v769 = vpop.xlane.xlu0 %768
        %v770 = vadd.f32 %v765, %v769
        %v771 = vmul.f32 %v770, 0.00390625
        %v772 = vadd.f32 %v771, 1e-05
        %v773 = vrsqrt.pop %v772
        %v774 = vmul.f32 %v760, %v773
        %v775 = vmul.f32 %v761, %v773
        %776 = vmatprep.subr.mxu0 0.0
        %777 = vmatpush1.msra.mxu0 %v385
        %778 = vmatprep.subr.mxu0 0.0
        %779 = vmatpush1.msra.mxu0 %v386
        %780 = vmatprep.subr.mxu0 0.0
        %781 = vmatpush1.msra.mxu0 %v387
        %782 = vmatprep.subr.mxu0 0.0
        %783 = vmatpush1.msra.mxu0 %v388
        %784 = vmatprep.subr.mxu0 0.0
        %785 = vmatpush1.msra.mxu0 %v389
        %786 = vmatprep.subr.mxu0 0.0
        %787 = vmatpush1.msra.mxu0 %v390
        %788 = vmatprep.subr.mxu0 0.0
        %789 = vmatpush1.msra.mxu0 %v391
        %790 = vmatprep.subr.mxu0 0.0
        %791 = vmatpush1.msra.mxu0 %v392
        %792 = vmatprep.subr.mxu0 0.0
        %793 = vmatpush1.msra.mxu0 %v393
        %794 = vmatprep.subr.mxu0 0.0
        %795 = vmatpush1.msra.mxu0 %v394
        %796 = vmatprep.subr.mxu0 0.0
        %797 = vmatpush1.msra.mxu0 %v395
        %798 = vmatprep.subr.mxu0 0.0
        %799 = vmatpush1.msra.mxu0 %v396
        %800 = vmatprep.subr.mxu0 0.0
        %801 = vmatpush1.msra.mxu0 %v397
        %802 = vmatprep.subr.mxu0 0.0
        %803 = vmatpush1.msra.mxu0 %v398
        %804 = vmatprep.subr.mxu0 0.0
        %805 = vmatpush1.msra.mxu0 %v399
        %806 = vmatprep.subr.mxu0 0.0
        %807 = vmatpush1.msra.mxu0 %v400
        %808 = vmatprep.subr.mxu0 0.0
        %809 = vmatpush1.msra.mxu0 0.0
        %810 = vmatprep.subr.mxu0 0.0
        %811 = vmatpush1.msra.mxu0 0.0
        %812 = vmatprep.subr.mxu0 0.0
        %813 = vmatpush1.msra.mxu0 0.0
        %814 = vmatprep.subr.mxu0 0.0
        %815 = vmatpush1.msra.mxu0 0.0
        %816 = vmatprep.subr.mxu0 0.0
        %817 = vmatpush1.msra.mxu0 0.0
        %818 = vmatprep.subr.mxu0 0.0
        %819 = vmatpush1.msra.mxu0 0.0
        %820 = vmatprep.subr.mxu0 0.0
        %821 = vmatpush1.msra.mxu0 0.0
        %822 = vmatprep.subr.mxu0 0.0
        %823 = vmatpush1.msra.mxu0 0.0
        %824 = vmatprep.subr.mxu0 0.0
        %825 = vmatpush1.msra.mxu0 0.0
        %826 = vmatprep.subr.mxu0 0.0
        %827 = vmatpush1.msra.mxu0 0.0
        %828 = vmatprep.subr.mxu0 0.0
        %829 = vmatpush1.msra.mxu0 0.0
        %830 = vmatprep.subr.mxu0 0.0
        %831 = vmatpush1.msra.mxu0 0.0
        %832 = vmatprep.subr.mxu0 0.0
        %833 = vmatpush1.msra.mxu0 0.0
        %834 = vmatprep.subr.mxu0 0.0
        %835 = vmatpush1.msra.mxu0 0.0
        %836 = vmatprep.subr.mxu0 0.0
        %837 = vmatpush1.msra.mxu0 0.0
        %838 = vmatprep.subr.mxu0 0.0
        %839 = vmatpush1.msra.mxu0 0.0
        %840 = vmatprep.mubr.f32.mxu0 0.0
        %841 = vmatmul.mubr.f32.gmra.mrb[0].mxu0 %v775
        %v842 = vpop.f32.mrb[0].mxu0
        %v843 = vadd.f32 0.0, %v842
        %v844 = vpop.f32.mrb[0].mxu0
        %845 = vdwg.mxu0
        %846 = vmatprep.subr.mxu0 0.0
        %847 = vmatpush1.msra.mxu0 %v369
        %848 = vmatprep.subr.mxu0 0.0
        %849 = vmatpush1.msra.mxu0 %v370
        %850 = vmatprep.subr.mxu0 0.0
        %851 = vmatpush1.msra.mxu0 %v371
        %852 = vmatprep.subr.mxu0 0.0
        %853 = vmatpush1.msra.mxu0 %v372
        %854 = vmatprep.subr.mxu0 0.0
        %855 = vmatpush1.msra.mxu0 %v373
        %856 = vmatprep.subr.mxu0 0.0
        %857 = vmatpush1.msra.mxu0 %v374
        %858 = vmatprep.subr.mxu0 0.0
        %859 = vmatpush1.msra.mxu0 %v375
        %860 = vmatprep.subr.mxu0 0.0
        %861 = vmatpush1.msra.mxu0 %v376
        %862 = vmatprep.subr.mxu0 0.0
        %863 = vmatpush1.msra.mxu0 %v377
        %864 = vmatprep.subr.mxu0 0.0
        %865 = vmatpush1.msra.mxu0 %v378
        %866 = vmatprep.subr.mxu0 0.0
        %867 = vmatpush1.msra.mxu0 %v379
        %868 = vmatprep.subr.mxu0 0.0
        %869 = vmatpush1.msra.mxu0 %v380
        %870 = vmatprep.subr.mxu0 0.0
        %871 = vmatpush1.msra.mxu0 %v381
        %872 = vmatprep.subr.mxu0 0.0
        %873 = vmatpush1.msra.mxu0 %v382
        %874 = vmatprep.subr.mxu0 0.0
        %875 = vmatpush1.msra.mxu0 %v383
        %876 = vmatprep.subr.mxu0 0.0
        %877 = vmatpush1.msra.mxu0 %v384
        %878 = vmatprep.subr.mxu0 0.0
        %879 = vmatpush1.msra.mxu0 0.0
        %880 = vmatprep.subr.mxu0 0.0
        %881 = vmatpush1.msra.mxu0 0.0
        %882 = vmatprep.subr.mxu0 0.0
        %883 = vmatpush1.msra.mxu0 0.0
        %884 = vmatprep.subr.mxu0 0.0
        %885 = vmatpush1.msra.mxu0 0.0
        %886 = vmatprep.subr.mxu0 0.0
        %887 = vmatpush1.msra.mxu0 0.0
        %888 = vmatprep.subr.mxu0 0.0
        %889 = vmatpush1.msra.mxu0 0.0
        %890 = vmatprep.subr.mxu0 0.0
        %891 = vmatpush1.msra.mxu0 0.0
        %892 = vmatprep.subr.mxu0 0.0
        %893 = vmatpush1.msra.mxu0 0.0
        %894 = vmatprep.subr.mxu0 0.0
        %895 = vmatpush1.msra.mxu0 0.0
        %896 = vmatprep.subr.mxu0 0.0
        %897 = vmatpush1.msra.mxu0 0.0
        %898 = vmatprep.subr.mxu0 0.0
        %899 = vmatpush1.msra.mxu0 0.0
        %900 = vmatprep.subr.mxu0 0.0
        %901 = vmatpush1.msra.mxu0 0.0
        %902 = vmatprep.subr.mxu0 0.0
        %903 = vmatpush1.msra.mxu0 0.0
        %904 = vmatprep.subr.mxu0 0.0
        %905 = vmatpush1.msra.mxu0 0.0
        %906 = vmatprep.subr.mxu0 0.0
        %907 = vmatpush1.msra.mxu0 0.0
        %908 = vmatprep.subr.mxu0 0.0
        %909 = vmatpush1.msra.mxu0 0.0
        %910 = vmatprep.mubr.f32.mxu0 0.0
        %911 = vmatmul.mubr.f32.gmra.mrb[0].mxu0 %v774
        %v912 = vpop.f32.mrb[0].mxu0
        %v913 = vadd.f32 %v843, %v912
        %v914 = vpop.f32.mrb[0].mxu0
        %915 = vdwg.mxu0
        %v916 = vadd.f32 %v913, %v406
        %s917 = scalar_lea.vmem %s362, 8 [#allocation10]
        %918 = vst [vmem:[%s917] sm:$0xf] %v916
        %s919 = scalar_lea.vmem %s314, 12 [#allocation2]
        %v920 = vld [vmem:[%s919] sm:$0xf]
        %s921 = scalar_lea.vmem %s323, 12 [#allocation5]
        %v922 = vld [vmem:[%s921] sm:$0xf]
        %v923 = vsel %vm410, %v920, 0.0
        %924 = vadd.xlane.f32.xlu0 %v923
        %v925 = vpop.xlane.xlu0 %924
        %v926 = vsel %vm410, %v922, 0.0
        %927 = vadd.xlane.f32.xlu0 %v926
        %v928 = vpop.xlane.xlu0 %927
        %v929 = vadd.f32 %v925, %v928
        %v930 = vmul.f32 %v929, 0.00390625
        %v931 = vsub.f32 %v920, %v930
        %v932 = vsub.f32 %v922, %v930
        %v933 = vmul.f32 %v931, %v931
        %v934 = vsel %vm410, %v933, 0.0
        %935 = vadd.xlane.f32.xlu0 %v934
        %v936 = vpop.xlane.xlu0 %935
        %v937 = vmul.f32 %v932, %v932
        %v938 = vsel %vm410, %v937, 0.0
        %939 = vadd.xlane.f32.xlu0 %v938
        %v940 = vpop.xlane.xlu0 %939
        %v941 = vadd.f32 %v936, %v940
        %v942 = vmul.f32 %v941, 0.00390625
        %v943 = vadd.f32 %v942, 1e-05
        %v944 = vrsqrt.pop %v943
        %v945 = vmul.f32 %v931, %v944
        %v946 = vmul.f32 %v932, %v944
        %947 = vmatprep.subr.mxu0 0.0
        %948 = vmatpush1.msra.mxu0 %v385
        %949 = vmatprep.subr.mxu0 0.0
        %950 = vmatpush1.msra.mxu0 %v386
        %951 = vmatprep.subr.mxu0 0.0
        %952 = vmatpush1.msra.mxu0 %v387
        %953 = vmatprep.subr.mxu0 0.0
        %954 = vmatpush1.msra.mxu0 %v388
        %955 = vmatprep.subr.mxu0 0.0
        %956 = vmatpush1.msra.mxu0 %v389
        %957 = vmatprep.subr.mxu0 0.0
        %958 = vmatpush1.msra.mxu0 %v390
        %959 = vmatprep.subr.mxu0 0.0
        %960 = vmatpush1.msra.mxu0 %v391
        %961 = vmatprep.subr.mxu0 0.0
        %962 = vmatpush1.msra.mxu0 %v392
        %963 = vmatprep.subr.mxu0 0.0
        %964 = vmatpush1.msra.mxu0 %v393
        %965 = vmatprep.subr.mxu0 0.0
        %966 = vmatpush1.msra.mxu0 %v394
        %967 = vmatprep.subr.mxu0 0.0
        %968 = vmatpush1.msra.mxu0 %v395
        %969 = vmatprep.subr.mxu0 0.0
        %970 = vmatpush1.msra.mxu0 %v396
        %971 = vmatprep.subr.mxu0 0.0
        %972 = vmatpush1.msra.mxu0 %v397
        %973 = vmatprep.subr.mxu0 0.0
        %974 = vmatpush1.msra.mxu0 %v398
        %975 = vmatprep.subr.mxu0 0.0
        %976 = vmatpush1.msra.mxu0 %v399
        %977 = vmatprep.subr.mxu0 0.0
        %978 = vmatpush1.msra.mxu0 %v400
        %979 = vmatprep.subr.mxu0 0.0
        %980 = vmatpush1.msra.mxu0 0.0
        %981 = vmatprep.subr.mxu0 0.0
        %982 = vmatpush1.msra.mxu0 0.0
        %983 = vmatprep.subr.mxu0 0.0
        %984 = vmatpush1.msra.mxu0 0.0
        %985 = vmatprep.subr.mxu0 0.0
        %986 = vmatpush1.msra.mxu0 0.0
        %987 = vmatprep.subr.mxu0 0.0
        %988 = vmatpush1.msra.mxu0 0.0
        %989 = vmatprep.subr.mxu0 0.0
        %990 = vmatpush1.msra.mxu0 0.0
        %991 = vmatprep.subr.mxu0 0.0
        %992 = vmatpush1.msra.mxu0 0.0
        %993 = vmatprep.subr.mxu0 0.0
        %994 = vmatpush1.msra.mxu0 0.0
        %995 = vmatprep.subr.mxu0 0.0
        %996 = vmatpush1.msra.mxu0 0.0
        %997 = vmatprep.subr.mxu0 0.0
        %998 = vmatpush1.msra.mxu0 0.0
        %999 = vmatprep.subr.mxu0 0.0
        %1000 = vmatpush1.msra.mxu0 0.0
        %1001 = vmatprep.subr.mxu0 0.0
        %1002 = vmatpush1.msra.mxu0 0.0
        %1003 = vmatprep.subr.mxu0 0.0
        %1004 = vmatpush1.msra.mxu0 0.0
        %1005 = vmatprep.subr.mxu0 0.0
        %1006 = vmatpush1.msra.mxu0 0.0
        %1007 = vmatprep.subr.mxu0 0.0
        %1008 = vmatpush1.msra.mxu0 0.0
        %1009 = vmatprep.subr.mxu0 0.0
        %1010 = vmatpush1.msra.mxu0 0.0
        %1011 = vmatprep.mubr.f32.mxu0 0.0
        %1012 = vmatmul.mubr.f32.gmra.mrb[0].mxu0 %v946
        %v1013 = vpop.f32.mrb[0].mxu0
        %v1014 = vadd.f32 0.0, %v1013
        %v1015 = vpop.f32.mrb[0].mxu0
        %1016 = vdwg.mxu0
        %1017 = vmatprep.subr.mxu0 0.0
        %1018 = vmatpush1.msra.mxu0 %v369
        %1019 = vmatprep.subr.mxu0 0.0
        %1020 = vmatpush1.msra.mxu0 %v370
        %1021 = vmatprep.subr.mxu0 0.0
        %1022 = vmatpush1.msra.mxu0 %v371
        %1023 = vmatprep.subr.mxu0 0.0
        %1024 = vmatpush1.msra.mxu0 %v372
        %1025 = vmatprep.subr.mxu0 0.0
        %1026 = vmatpush1.msra.mxu0 %v373
        %1027 = vmatprep.subr.mxu0 0.0
        %1028 = vmatpush1.msra.mxu0 %v374
        %1029 = vmatprep.subr.mxu0 0.0
        %1030 = vmatpush1.msra.mxu0 %v375
        %1031 = vmatprep.subr.mxu0 0.0
        %1032 = vmatpush1.msra.mxu0 %v376
        %1033 = vmatprep.subr.mxu0 0.0
        %1034 = vmatpush1.msra.mxu0 %v377
        %1035 = vmatprep.subr.mxu0 0.0
        %1036 = vmatpush1.msra.mxu0 %v378
        %1037 = vmatprep.subr.mxu0 0.0
        %1038 = vmatpush1.msra.mxu0 %v379
        %1039 = vmatprep.subr.mxu0 0.0
        %1040 = vmatpush1.msra.mxu0 %v380
        %1041 = vmatprep.subr.mxu0 0.0
        %1042 = vmatpush1.msra.mxu0 %v381
        %1043 = vmatprep.subr.mxu0 0.0
        %1044 = vmatpush1.msra.mxu0 %v382
        %1045 = vmatprep.subr.mxu0 0.0
        %1046 = vmatpush1.msra.mxu0 %v383
        %1047 = vmatprep.subr.mxu0 0.0
        %1048 = vmatpush1.msra.mxu0 %v384
        %1049 = vmatprep.subr.mxu0 0.0
        %1050 = vmatpush1.msra.mxu0 0.0
        %1051 = vmatprep.subr.mxu0 0.0
        %1052 = vmatpush1.msra.mxu0 0.0
        %1053 = vmatprep.subr.mxu0 0.0
        %1054 = vmatpush1.msra.mxu0 0.0
        %1055 = vmatprep.subr.mxu0 0.0
        %1056 = vmatpush1.msra.mxu0 0.0
        %1057 = vmatprep.subr.mxu0 0.0
        %1058 = vmatpush1.msra.mxu0 0.0
        %1059 = vmatprep.subr.mxu0 0.0
        %1060 = vmatpush1.msra.mxu0 0.0
        %1061 = vmatprep.subr.mxu0 0.0
        %1062 = vmatpush1.msra.mxu0 0.0
        %1063 = vmatprep.subr.mxu0 0.0
        %1064 = vmatpush1.msra.mxu0 0.0
        %1065 = vmatprep.subr.mxu0 0.0
        %1066 = vmatpush1.msra.mxu0 0.0
        %1067 = vmatprep.subr.mxu0 0.0
        %1068 = vmatpush1.msra.mxu0 0.0
        %1069 = vmatprep.subr.mxu0 0.0
        %1070 = vmatpush1.msra.mxu0 0.0
        %1071 = vmatprep.subr.mxu0 0.0
        %1072 = vmatpush1.msra.mxu0 0.0
        %1073 = vmatprep.subr.mxu0 0.0
        %1074 = vmatpush1.msra.mxu0 0.0
        %1075 = vmatprep.subr.mxu0 0.0
        %1076 = vmatpush1.msra.mxu0 0.0
        %1077 = vmatprep.subr.mxu0 0.0
        %1078 = vmatpush1.msra.mxu0 0.0
        %1079 = vmatprep.subr.mxu0 0.0
        %1080 = vmatpush1.msra.mxu0 0.0
        %1081 = vmatprep.mubr.f32.mxu0 0.0
        %1082 = vmatmul.mubr.f32.gmra.mrb[0].mxu0 %v945
        %v1083 = vpop.f32.mrb[0].mxu0
        %v1084 = vadd.f32 %v1014, %v1083
        %v1085 = vpop.f32.mrb[0].mxu0
        %1086 = vdwg.mxu0
        %v1087 = vadd.f32 %v1084, %v406
        %s1088 = scalar_lea.vmem %s362, 12 [#allocation10]
        %1089 = vst [vmem:[%s1088] sm:$0xf] %v1087
        %s1090 = sand.u32 %s186, 1
        %s1091 = scalar_lea.sflag [#allocation4], %s1090
        %s1092 = sand.u32 %s186, 1
        %s1093 = smul.addr %s1092, 16
        %s1094 = scalar_lea.vmem [#allocation10], %s1093
        // Predicated region
        $region57: #{tpu_custom_call.1} parent=39 // pred_check
          %p1095 = pneg %p196
        $region58: #{tpu_custom_call.1} parent=39 // pred_check_branch
          %1097 = sbr.rel (%p1095) target = $region60
        $region59: #{tpu_custom_call.1} parent=39 // pred_region
          %s1098 = smul.u32 4, %s33
          %s1100 = ssub.s32 256, 256
          %1101 = vsyncadd %s1091, %s1100
          %s1102 = smul.addr %s32, 4
          %s1103 = sadd.s32 %s1098, %s1102
          %s1104 = smul.addr %s31, 16
          %s1105 = sadd.s32 %s1103, %s1104
          %s1106 = smul.addr %s1105, 64
          %s1107 = scalar_lea.hbm %s5, %s1106
          %s1108 = sshll.u32 %s1094, 4
          %s1109 = int_to_ptr.vmem [resolvable:$true] %s1108
          %1114 = dma.vmem_to_hbm [thread:$0]  %s1109, 256, %s1107, %s1091, 64, 64, 4
        $region60: #{tpu_custom_call.1} parent=39 // pred_fallthru
          _
      $region40: #{tpu_custom_call.1} parent=5 // pred_fallthru
        _
      %p1115 = scmp.le.s32.totalorder 2, %s21
      // Predicated region
      $region61: #{tpu_custom_call.1} parent=5 // pred_check
        %p1116 = pneg %p1115
      $region62: #{tpu_custom_call.1} parent=5 // pred_check_branch
        %1118 = sbr.rel (%p1116) target = $region64
      $region63: #{tpu_custom_call.1} parent=5 // pred_region
        %s1119 = ssub.s32 %s21, 2
        // Predicated region
        $region65: #{tpu_custom_call.1} parent=63 // pred_check
          %p1120 = pneg %p202
        $region66: #{tpu_custom_call.1} parent=63 // pred_check_branch
          %1122 = sbr.rel (%p1120) target = $region68
        $region67: #{tpu_custom_call.1} parent=63 // pred_region
          %s1123 = sand.u32 %s187, 1
          %s1124 = scalar_lea.sflag [#allocation4], %s1123
          %s1125 = sand.u32 %s187, 1
          %s1126 = smul.addr %s1125, 16
          %s1127 = scalar_lea.vmem [#allocation10], %s1126
          %1128 = dma.done %s1124, 256
        $region68: #{tpu_custom_call.1} parent=63 // pred_fallthru
          _
      $region64: #{tpu_custom_call.1} parent=5 // pred_fallthru
        _
    $region6: #{tpu_custom_call.1} parent=1 // loop_footer
      %s25 = sadd.s32 1, %s21
    $region7: #{tpu_custom_call.1} parent=1 // loop_footer_branch
      %20 = sbr.rel target = $region3
    $region8: #{tpu_custom_call.1} parent=1 // loop_exit
      _
    %1129 = vsyncpa [#allocation3], 1
    %s1130 = scalar_lea.sflag [#allocation3], 1
    %1131 = vsyncpa %s1130, 1
    %1132 = vsyncpa [#allocation6], 1
    %s1133 = scalar_lea.sflag [#allocation6], 1
    %1134 = vsyncpa %s1133, 1
    %1135 = vsyncpa [#allocation9], 1
    %1136 = vsyncpa [#allocation4], 1
    %s1137 = scalar_lea.sflag [#allocation4], 1
    %1138 = vsyncpa %s1137, 1

</llo_original>
